<compile_context>
chip_gen: v6e
topology: v6e:2x2x1
jax: 0.10.0
libtpu: 0.0.40
codegen_flags: <defaults>
</compile_context>

<pallas_src>
import jax
import jax.numpy as jnp
from jax.experimental import pallas as pl
from jax.experimental.pallas import tpu as pltpu


def _make_rnn_kernel(B, W, I, H, num_layers):
    def kernel(*refs):
        x_ref = refs[0]                              # (W*B, I)
        layer_refs = refs[1:1 + 3 * num_layers]      # per layer: wihT, whhT, bias
        linw_ref = refs[1 + 3 * num_layers]          # (W*H, I)
        linb_ref = refs[2 + 3 * num_layers]          # (1, I)
        out_ref = refs[3 + 3 * num_layers]           # (B, I)
        hseq_ref = refs[4 + 3 * num_layers]          # VMEM scratch (W*B, H)
        head_ref = refs[5 + 3 * num_layers]          # VMEM scratch (B, W*H)

        cur = x_ref[...]                             # layer input, w slow / b fast
        for l in range(num_layers):
            wihT = layer_refs[3 * l][...]            # (in_l, H)
            whhT = layer_refs[3 * l + 1][...]        # (H, H)  (already transposed)
            bias = layer_refs[3 * l + 2][...]        # (1, H)  = b_ih + b_hh
            # Hoisted input projection: one matmul per layer for all time steps.
            ih_all = jnp.dot(cur, wihT, preferred_element_type=jnp.float32) + bias
            last = (l == num_layers - 1)
            h = None
            for t in range(W):                       # static unroll (W is small)
                ih_t = ih_all[t * B:(t + 1) * B, :]  # (B, H) contiguous rows
                if t == 0:
                    # h0 == 0 (PyTorch default) -> skip the dead h@whh matmul.
                    h = jnp.tanh(ih_t)
                else:
                    hh = jnp.dot(h, whhT, preferred_element_type=jnp.float32)
                    h = jnp.tanh(ih_t + hh)
                if last:
                    # second tanh (module applies tanh to RNN outputs), laid out
                    # in flatten order (w slow, h fast) for the fused head.
                    head_ref[:, t * H:(t + 1) * H] = jnp.tanh(h)
                else:
                    hseq_ref[t * B:(t + 1) * B, :] = h
            if not last:
                cur = hseq_ref[...]                  # (W*B, H) input to next layer

        # TODO(synk): nn.Dropout is identity in eval mode; stochastic
        # training-mode dropout is not implemented here.

        # Fused Flatten + Linear: single matmul + bias (lane-dense output).
        out_ref[...] = (jnp.dot(head_ref[...], linw_ref[...],
                                preferred_element_type=jnp.float32)
                        + linb_ref[...])

    return kernel


def rnn_model_forward(x, params, *, hidden_size, num_layers):
    """x: (batch, input_size, window_size) float32 -> (batch, input_size)."""
    B, I, W = x.shape
    H = hidden_size

    # Glue (trace-time XLA, done once): NCW -> (W, B, I) -> flat (W*B, I);
    # pre-transpose weights and pre-add the two RNN biases.
    x2d = jnp.transpose(x, (2, 0, 1)).reshape(W * B, I).astype(jnp.float32)

    flat_inputs = [x2d]
    for l in range(num_layers):
        w_ih, w_hh, b_ih, b_hh = params["rnn"][l]
        flat_inputs += [jnp.transpose(w_ih).astype(jnp.float32),       # (in_l, H)
                        jnp.transpose(w_hh).astype(jnp.float32),       # (H, H)
                        (b_ih + b_hh).reshape(1, H).astype(jnp.float32)]
    flat_inputs += [jnp.transpose(params["lin_w"]).astype(jnp.float32),  # (W*H, I)
                    params["lin_b"].reshape(1, I).astype(jnp.float32)]

    def full_spec(a):
        return pl.BlockSpec(a.shape, lambda i: (0, 0))   # all operands are 2D

    kernel = _make_rnn_kernel(B, W, I, H, num_layers)
    out = pl.pallas_call(
        kernel,
        out_shape=jax.ShapeDtypeStruct((B, I), jnp.float32),
        grid=(1,),
        in_specs=[full_spec(a) for a in flat_inputs],
        out_specs=pl.BlockSpec((B, I), lambda i: (0, 0)),
        scratch_shapes=[pltpu.VMEM((W * B, H), jnp.float32),   # per-layer output seq
                        pltpu.VMEM((B, W * H), jnp.float32)],  # flattened head input
        compiler_params=pltpu.CompilerParams(dimension_semantics=("arbitrary",)),
    )(*flat_inputs)
    return out


def init_params(key, input_size, hidden_size, window_size, num_layers):
    """Deterministic synthetic init matching the nn.Module's parameter shapes."""
    H, I, W = hidden_size, input_size, window_size
    keys = jax.random.split(key, 4 * num_layers + 2)
    k = 1.0 / float(H) ** 0.5
    rnn, idx = [], 0
    for l in range(num_layers):
        in_l = I if l == 0 else H
        w_ih = jax.random.uniform(keys[idx], (H, in_l), jnp.float32, -k, k); idx += 1
        w_hh = jax.random.uniform(keys[idx], (H, H), jnp.float32, -k, k); idx += 1
        b_ih = jax.random.uniform(keys[idx], (H,), jnp.float32, -k, k); idx += 1
        b_hh = jax.random.uniform(keys[idx], (H,), jnp.float32, -k, k); idx += 1
        rnn.append((w_ih, w_hh, b_ih, b_hh))
    k2 = 1.0 / float(H * W) ** 0.5
    lin_w = jax.random.uniform(keys[idx], (I, H * W), jnp.float32, -k2, k2); idx += 1
    lin_b = jax.random.uniform(keys[idx], (I,), jnp.float32, -k2, k2)
    return {"rnn": rnn, "lin_w": lin_w, "lin_b": lin_b}


def reference_forward(x, params):
    """Pure-JAX reference mirroring the PyTorch forward (eval mode)."""
    B, I, W = x.shape
    h_seq = jnp.transpose(x, (0, 2, 1)).astype(jnp.float32)   # (B, W, I)
    for (w_ih, w_hh, b_ih, b_hh) in params["rnn"]:
        H = w_hh.shape[0]
        h = jnp.zeros((B, H), jnp.float32)
        outs = []
        for t in range(W):
            h = jnp.tanh(h_seq[:, t, :] @ w_ih.T + b_ih + h @ w_hh.T + b_hh)
            outs.append(h)
        h_seq = jnp.stack(outs, axis=1)
    y = jnp.tanh(h_seq).reshape(B, -1)                        # dropout = identity (eval)
    return y @ params["lin_w"].T + params["lin_b"]


if __name__ == "__main__":
    # RNNModel(dropout, input_size=4, hidden_size=32, window_size=8, num_layers=2);
    # x is (batch, input_size, window_size).
    batch, input_size, hidden_size, window_size, num_layers = 2, 4, 32, 8, 2

    key = jax.random.PRNGKey(0)
    pkey, xkey = jax.random.split(key)
    params = init_params(pkey, input_size, hidden_size, window_size, num_layers)
    x = jax.random.normal(xkey, (batch, input_size, window_size), jnp.float32)

    out = rnn_model_forward(x, params, hidden_size=hidden_size, num_layers=num_layers)
    out = jax.block_until_ready(out)
    assert out.shape == (batch, input_size)

    ref = jax.block_until_ready(reference_forward(x, params))
    assert jnp.allclose(out, ref, atol=2e-3, rtol=2e-3), (out, ref)

    print("KERNEL_OK")
</pallas_src>

<mosaic_0001>
module attributes {stable_mosaic.version = 11 : i64} {
  func.func @kernel(%arg0: i32, %arg1: memref<16x4xf32, #tpu.memory_space<vmem>>, %arg2: memref<4x32xf32, #tpu.memory_space<vmem>>, %arg3: memref<32x32xf32, #tpu.memory_space<vmem>>, %arg4: memref<1x32xf32, #tpu.memory_space<vmem>>, %arg5: memref<32x32xf32, #tpu.memory_space<vmem>>, %arg6: memref<32x32xf32, #tpu.memory_space<vmem>>, %arg7: memref<1x32xf32, #tpu.memory_space<vmem>>, %arg8: memref<256x4xf32, #tpu.memory_space<vmem>>, %arg9: memref<1x4xf32, #tpu.memory_space<vmem>>, %arg10: memref<2x4xf32, #tpu.memory_space<vmem>>, %arg11: memref<16x32xf32, #tpu.memory_space<vmem>>, %arg12: memref<2x256xf32, #tpu.memory_space<vmem>>) attributes {dimension_semantics = [#tpu.dimension_semantics<arbitrary>], iteration_bounds = array<i64: 1>, scalar_prefetch = 0 : i64, scratch_operands = 2 : i64, tpu.core_type = #tpu.core_type<tc>, window_params = [{pipeline_mode = #tpu.pipeline_mode<synchronous>, transform_indices = @transform_0, window_bounds = array<i64: 16, 4>}, {pipeline_mode = #tpu.pipeline_mode<synchronous>, transform_indices = @transform_1, window_bounds = array<i64: 4, 32>}, {pipeline_mode = #tpu.pipeline_mode<synchronous>, transform_indices = @transform_2, window_bounds = array<i64: 32, 32>}, {pipeline_mode = #tpu.pipeline_mode<synchronous>, transform_indices = @transform_3, window_bounds = array<i64: 1, 32>}, {pipeline_mode = #tpu.pipeline_mode<synchronous>, transform_indices = @transform_4, window_bounds = array<i64: 32, 32>}, {pipeline_mode = #tpu.pipeline_mode<synchronous>, transform_indices = @transform_5, window_bounds = array<i64: 32, 32>}, {pipeline_mode = #tpu.pipeline_mode<synchronous>, transform_indices = @transform_6, window_bounds = array<i64: 1, 32>}, {pipeline_mode = #tpu.pipeline_mode<synchronous>, transform_indices = @transform_7, window_bounds = array<i64: 256, 4>}, {pipeline_mode = #tpu.pipeline_mode<synchronous>, transform_indices = @transform_8, window_bounds = array<i64: 1, 4>}, {pipeline_mode = #tpu.pipeline_mode<synchronous>, transform_indices = @transform_9, window_bounds = array<i64: 2, 4>}]} {
    %c0 = arith.constant 0 : index
    %c0_0 = arith.constant 0 : index
    %0 = vector.load %arg1[%c0, %c0_0] : memref<16x4xf32, #tpu.memory_space<vmem>>, vector<16x4xf32>
    %c0_1 = arith.constant 0 : index
    %c0_2 = arith.constant 0 : index
    %1 = vector.load %arg2[%c0_1, %c0_2] : memref<4x32xf32, #tpu.memory_space<vmem>>, vector<4x32xf32>
    %c0_3 = arith.constant 0 : index
    %c0_4 = arith.constant 0 : index
    %2 = vector.load %arg3[%c0_3, %c0_4] : memref<32x32xf32, #tpu.memory_space<vmem>>, vector<32x32xf32>
    %c0_5 = arith.constant 0 : index
    %c0_6 = arith.constant 0 : index
    %3 = vector.load %arg4[%c0_5, %c0_6] : memref<1x32xf32, #tpu.memory_space<vmem>>, vector<1x32xf32>
    %cst = arith.constant dense<0.000000e+00> : vector<16x32xf32>
    %4 = tpu.matmul %0, %1, %cst {dimension_numbers = #tpu.dot_dimension_numbers<[1], [0], [0], [1], [0, 0, 1, 1], [], []>} : vector<16x4xf32>, vector<4x32xf32>, vector<16x32xf32> -> vector<16x32xf32>
    %5 = vector.broadcast %3 : vector<1x32xf32> to vector<16x32xf32>
    %6 = arith.addf %4, %5 : vector<16x32xf32>
    %7 = vector.extract_strided_slice %6 {offsets = [0, 0], sizes = [2, 32], strides = [1, 1]} : vector<16x32xf32> to vector<2x32xf32>
    %8 = math.tanh %7 : vector<2x32xf32>
    %c0_7 = arith.constant 0 : index
    %c0_8 = arith.constant 0 : index
    %9 = vector.load %arg11[%c0_7, %c0_8] : memref<16x32xf32, #tpu.memory_space<vmem>>, vector<2x32xf32>
    tpu.vector_store %arg11[%c0_7, %c0_8], %8 {strides = array<i32>} : memref<16x32xf32, #tpu.memory_space<vmem>>, vector<2x32xf32>,
    %10 = vector.extract_strided_slice %6 {offsets = [2, 0], sizes = [2, 32], strides = [1, 1]} : vector<16x32xf32> to vector<2x32xf32>
    %cst_9 = arith.constant dense<0.000000e+00> : vector<2x32xf32>
    %11 = tpu.matmul %8, %2, %cst_9 {dimension_numbers = #tpu.dot_dimension_numbers<[1], [0], [0], [1], [0, 0, 1, 1], [], []>} : vector<2x32xf32>, vector<32x32xf32>, vector<2x32xf32> -> vector<2x32xf32>
    %12 = arith.addf %10, %11 : vector<2x32xf32>
    %13 = math.tanh %12 : vector<2x32xf32>
    %c2 = arith.constant 2 : index
    %c0_10 = arith.constant 0 : index
    %14 = vector.load %arg11[%c2, %c0_10] : memref<16x32xf32, #tpu.memory_space<vmem>>, vector<2x32xf32>
    tpu.vector_store %arg11[%c2, %c0_10], %13 {strides = array<i32>} : memref<16x32xf32, #tpu.memory_space<vmem>>, vector<2x32xf32>,
    %15 = vector.extract_strided_slice %6 {offsets = [4, 0], sizes = [2, 32], strides = [1, 1]} : vector<16x32xf32> to vector<2x32xf32>
    %cst_11 = arith.constant dense<0.000000e+00> : vector<2x32xf32>
    %16 = tpu.matmul %13, %2, %cst_11 {dimension_numbers = #tpu.dot_dimension_numbers<[1], [0], [0], [1], [0, 0, 1, 1], [], []>} : vector<2x32xf32>, vector<32x32xf32>, vector<2x32xf32> -> vector<2x32xf32>
    %17 = arith.addf %15, %16 : vector<2x32xf32>
    %18 = math.tanh %17 : vector<2x32xf32>
    %c4 = arith.constant 4 : index
    %c0_12 = arith.constant 0 : index
    %19 = vector.load %arg11[%c4, %c0_12] : memref<16x32xf32, #tpu.memory_space<vmem>>, vector<2x32xf32>
    tpu.vector_store %arg11[%c4, %c0_12], %18 {strides = array<i32>} : memref<16x32xf32, #tpu.memory_space<vmem>>, vector<2x32xf32>,
    %20 = vector.extract_strided_slice %6 {offsets = [6, 0], sizes = [2, 32], strides = [1, 1]} : vector<16x32xf32> to vector<2x32xf32>
    %cst_13 = arith.constant dense<0.000000e+00> : vector<2x32xf32>
    %21 = tpu.matmul %18, %2, %cst_13 {dimension_numbers = #tpu.dot_dimension_numbers<[1], [0], [0], [1], [0, 0, 1, 1], [], []>} : vector<2x32xf32>, vector<32x32xf32>, vector<2x32xf32> -> vector<2x32xf32>
    %22 = arith.addf %20, %21 : vector<2x32xf32>
    %23 = math.tanh %22 : vector<2x32xf32>
    %c6 = arith.constant 6 : index
    %c0_14 = arith.constant 0 : index
    %24 = vector.load %arg11[%c6, %c0_14] : memref<16x32xf32, #tpu.memory_space<vmem>>, vector<2x32xf32>
    tpu.vector_store %arg11[%c6, %c0_14], %23 {strides = array<i32>} : memref<16x32xf32, #tpu.memory_space<vmem>>, vector<2x32xf32>,
    %25 = vector.extract_strided_slice %6 {offsets = [8, 0], sizes = [2, 32], strides = [1, 1]} : vector<16x32xf32> to vector<2x32xf32>
    %cst_15 = arith.constant dense<0.000000e+00> : vector<2x32xf32>
    %26 = tpu.matmul %23, %2, %cst_15 {dimension_numbers = #tpu.dot_dimension_numbers<[1], [0], [0], [1], [0, 0, 1, 1], [], []>} : vector<2x32xf32>, vector<32x32xf32>, vector<2x32xf32> -> vector<2x32xf32>
    %27 = arith.addf %25, %26 : vector<2x32xf32>
    %28 = math.tanh %27 : vector<2x32xf32>
    %c8 = arith.constant 8 : index
    %c0_16 = arith.constant 0 : index
    %29 = vector.load %arg11[%c8, %c0_16] : memref<16x32xf32, #tpu.memory_space<vmem>>, vector<2x32xf32>
    tpu.vector_store %arg11[%c8, %c0_16], %28 {strides = array<i32>} : memref<16x32xf32, #tpu.memory_space<vmem>>, vector<2x32xf32>,
    %30 = vector.extract_strided_slice %6 {offsets = [10, 0], sizes = [2, 32], strides = [1, 1]} : vector<16x32xf32> to vector<2x32xf32>
    %cst_17 = arith.constant dense<0.000000e+00> : vector<2x32xf32>
    %31 = tpu.matmul %28, %2, %cst_17 {dimension_numbers = #tpu.dot_dimension_numbers<[1], [0], [0], [1], [0, 0, 1, 1], [], []>} : vector<2x32xf32>, vector<32x32xf32>, vector<2x32xf32> -> vector<2x32xf32>
    %32 = arith.addf %30, %31 : vector<2x32xf32>
    %33 = math.tanh %32 : vector<2x32xf32>
    %c10 = arith.constant 10 : index
    %c0_18 = arith.constant 0 : index
    %34 = vector.load %arg11[%c10, %c0_18] : memref<16x32xf32, #tpu.memory_space<vmem>>, vector<2x32xf32>
    tpu.vector_store %arg11[%c10, %c0_18], %33 {strides = array<i32>} : memref<16x32xf32, #tpu.memory_space<vmem>>, vector<2x32xf32>,
    %35 = vector.extract_strided_slice %6 {offsets = [12, 0], sizes = [2, 32], strides = [1, 1]} : vector<16x32xf32> to vector<2x32xf32>
    %cst_19 = arith.constant dense<0.000000e+00> : vector<2x32xf32>
    %36 = tpu.matmul %33, %2, %cst_19 {dimension_numbers = #tpu.dot_dimension_numbers<[1], [0], [0], [1], [0, 0, 1, 1], [], []>} : vector<2x32xf32>, vector<32x32xf32>, vector<2x32xf32> -> vector<2x32xf32>
    %37 = arith.addf %35, %36 : vector<2x32xf32>
    %38 = math.tanh %37 : vector<2x32xf32>
    %c12 = arith.constant 12 : index
    %c0_20 = arith.constant 0 : index
    %39 = vector.load %arg11[%c12, %c0_20] : memref<16x32xf32, #tpu.memory_space<vmem>>, vector<2x32xf32>
    tpu.vector_store %arg11[%c12, %c0_20], %38 {strides = array<i32>} : memref<16x32xf32, #tpu.memory_space<vmem>>, vector<2x32xf32>,
    %40 = vector.extract_strided_slice %6 {offsets = [14, 0], sizes = [2, 32], strides = [1, 1]} : vector<16x32xf32> to vector<2x32xf32>
    %cst_21 = arith.constant dense<0.000000e+00> : vector<2x32xf32>
    %41 = tpu.matmul %38, %2, %cst_21 {dimension_numbers = #tpu.dot_dimension_numbers<[1], [0], [0], [1], [0, 0, 1, 1], [], []>} : vector<2x32xf32>, vector<32x32xf32>, vector<2x32xf32> -> vector<2x32xf32>
    %42 = arith.addf %40, %41 : vector<2x32xf32>
    %43 = math.tanh %42 : vector<2x32xf32>
    %c14 = arith.constant 14 : index
    %c0_22 = arith.constant 0 : index
    %44 = vector.load %arg11[%c14, %c0_22] : memref<16x32xf32, #tpu.memory_space<vmem>>, vector<2x32xf32>
    tpu.vector_store %arg11[%c14, %c0_22], %43 {strides = array<i32>} : memref<16x32xf32, #tpu.memory_space<vmem>>, vector<2x32xf32>,
    %c0_23 = arith.constant 0 : index
    %c0_24 = arith.constant 0 : index
    %45 = vector.load %arg11[%c0_23, %c0_24] : memref<16x32xf32, #tpu.memory_space<vmem>>, vector<16x32xf32>
    %c0_25 = arith.constant 0 : index
    %c0_26 = arith.constant 0 : index
    %46 = vector.load %arg5[%c0_25, %c0_26] : memref<32x32xf32, #tpu.memory_space<vmem>>, vector<32x32xf32>
    %c0_27 = arith.constant 0 : index
    %c0_28 = arith.constant 0 : index
    %47 = vector.load %arg6[%c0_27, %c0_28] : memref<32x32xf32, #tpu.memory_space<vmem>>, vector<32x32xf32>
    %c0_29 = arith.constant 0 : index
    %c0_30 = arith.constant 0 : index
    %48 = vector.load %arg7[%c0_29, %c0_30] : memref<1x32xf32, #tpu.memory_space<vmem>>, vector<1x32xf32>
    %cst_31 = arith.constant dense<0.000000e+00> : vector<16x32xf32>
    %49 = tpu.matmul %45, %46, %cst_31 {dimension_numbers = #tpu.dot_dimension_numbers<[1], [0], [0], [1], [0, 0, 1, 1], [], []>} : vector<16x32xf32>, vector<32x32xf32>, vector<16x32xf32> -> vector<16x32xf32>
    %50 = vector.broadcast %48 : vector<1x32xf32> to vector<16x32xf32>
    %51 = arith.addf %49, %50 : vector<16x32xf32>
    %52 = vector.extract_strided_slice %51 {offsets = [0, 0], sizes = [2, 32], strides = [1, 1]} : vector<16x32xf32> to vector<2x32xf32>
    %53 = math.tanh %52 : vector<2x32xf32>
    %54 = math.tanh %53 : vector<2x32xf32>
    %c0_32 = arith.constant 0 : index
    %c0_33 = arith.constant 0 : index
    %55 = vector.load %arg12[%c0_32, %c0_33] : memref<2x256xf32, #tpu.memory_space<vmem>>, vector<2x32xf32>
    tpu.vector_store %arg12[%c0_32, %c0_33], %54 {strides = array<i32>} : memref<2x256xf32, #tpu.memory_space<vmem>>, vector<2x32xf32>,
    %56 = vector.extract_strided_slice %51 {offsets = [2, 0], sizes = [2, 32], strides = [1, 1]} : vector<16x32xf32> to vector<2x32xf32>
    %cst_34 = arith.constant dense<0.000000e+00> : vector<2x32xf32>
    %57 = tpu.matmul %53, %47, %cst_34 {dimension_numbers = #tpu.dot_dimension_numbers<[1], [0], [0], [1], [0, 0, 1, 1], [], []>} : vector<2x32xf32>, vector<32x32xf32>, vector<2x32xf32> -> vector<2x32xf32>
    %58 = arith.addf %56, %57 : vector<2x32xf32>
    %59 = math.tanh %58 : vector<2x32xf32>
    %60 = math.tanh %59 : vector<2x32xf32>
    %c0_35 = arith.constant 0 : index
    %c32 = arith.constant 32 : index
    %61 = vector.load %arg12[%c0_35, %c32] : memref<2x256xf32, #tpu.memory_space<vmem>>, vector<2x32xf32>
    tpu.vector_store %arg12[%c0_35, %c32], %60 {strides = array<i32>} : memref<2x256xf32, #tpu.memory_space<vmem>>, vector<2x32xf32>,
    %62 = vector.extract_strided_slice %51 {offsets = [4, 0], sizes = [2, 32], strides = [1, 1]} : vector<16x32xf32> to vector<2x32xf32>
    %cst_36 = arith.constant dense<0.000000e+00> : vector<2x32xf32>
    %63 = tpu.matmul %59, %47, %cst_36 {dimension_numbers = #tpu.dot_dimension_numbers<[1], [0], [0], [1], [0, 0, 1, 1], [], []>} : vector<2x32xf32>, vector<32x32xf32>, vector<2x32xf32> -> vector<2x32xf32>
    %64 = arith.addf %62, %63 : vector<2x32xf32>
    %65 = math.tanh %64 : vector<2x32xf32>
    %66 = math.tanh %65 : vector<2x32xf32>
    %c0_37 = arith.constant 0 : index
    %c64 = arith.constant 64 : index
    %67 = vector.load %arg12[%c0_37, %c64] : memref<2x256xf32, #tpu.memory_space<vmem>>, vector<2x32xf32>
    tpu.vector_store %arg12[%c0_37, %c64], %66 {strides = array<i32>} : memref<2x256xf32, #tpu.memory_space<vmem>>, vector<2x32xf32>,
    %68 = vector.extract_strided_slice %51 {offsets = [6, 0], sizes = [2, 32], strides = [1, 1]} : vector<16x32xf32> to vector<2x32xf32>
    %cst_38 = arith.constant dense<0.000000e+00> : vector<2x32xf32>
    %69 = tpu.matmul %65, %47, %cst_38 {dimension_numbers = #tpu.dot_dimension_numbers<[1], [0], [0], [1], [0, 0, 1, 1], [], []>} : vector<2x32xf32>, vector<32x32xf32>, vector<2x32xf32> -> vector<2x32xf32>
    %70 = arith.addf %68, %69 : vector<2x32xf32>
    %71 = math.tanh %70 : vector<2x32xf32>
    %72 = math.tanh %71 : vector<2x32xf32>
    %c0_39 = arith.constant 0 : index
    %c96 = arith.constant 96 : index
    %73 = vector.load %arg12[%c0_39, %c96] : memref<2x256xf32, #tpu.memory_space<vmem>>, vector<2x32xf32>
    tpu.vector_store %arg12[%c0_39, %c96], %72 {strides = array<i32>} : memref<2x256xf32, #tpu.memory_space<vmem>>, vector<2x32xf32>,
    %74 = vector.extract_strided_slice %51 {offsets = [8, 0], sizes = [2, 32], strides = [1, 1]} : vector<16x32xf32> to vector<2x32xf32>
    %cst_40 = arith.constant dense<0.000000e+00> : vector<2x32xf32>
    %75 = tpu.matmul %71, %47, %cst_40 {dimension_numbers = #tpu.dot_dimension_numbers<[1], [0], [0], [1], [0, 0, 1, 1], [], []>} : vector<2x32xf32>, vector<32x32xf32>, vector<2x32xf32> -> vector<2x32xf32>
    %76 = arith.addf %74, %75 : vector<2x32xf32>
    %77 = math.tanh %76 : vector<2x32xf32>
    %78 = math.tanh %77 : vector<2x32xf32>
    %c0_41 = arith.constant 0 : index
    %c128 = arith.constant 128 : index
    %79 = vector.load %arg12[%c0_41, %c128] : memref<2x256xf32, #tpu.memory_space<vmem>>, vector<2x32xf32>
    tpu.vector_store %arg12[%c0_41, %c128], %78 {strides = array<i32>} : memref<2x256xf32, #tpu.memory_space<vmem>>, vector<2x32xf32>,
    %80 = vector.extract_strided_slice %51 {offsets = [10, 0], sizes = [2, 32], strides = [1, 1]} : vector<16x32xf32> to vector<2x32xf32>
    %cst_42 = arith.constant dense<0.000000e+00> : vector<2x32xf32>
    %81 = tpu.matmul %77, %47, %cst_42 {dimension_numbers = #tpu.dot_dimension_numbers<[1], [0], [0], [1], [0, 0, 1, 1], [], []>} : vector<2x32xf32>, vector<32x32xf32>, vector<2x32xf32> -> vector<2x32xf32>
    %82 = arith.addf %80, %81 : vector<2x32xf32>
    %83 = math.tanh %82 : vector<2x32xf32>
    %84 = math.tanh %83 : vector<2x32xf32>
    %c0_43 = arith.constant 0 : index
    %c160 = arith.constant 160 : index
    %85 = vector.load %arg12[%c0_43, %c160] : memref<2x256xf32, #tpu.memory_space<vmem>>, vector<2x32xf32>
    tpu.vector_store %arg12[%c0_43, %c160], %84 {strides = array<i32>} : memref<2x256xf32, #tpu.memory_space<vmem>>, vector<2x32xf32>,
    %86 = vector.extract_strided_slice %51 {offsets = [12, 0], sizes = [2, 32], strides = [1, 1]} : vector<16x32xf32> to vector<2x32xf32>
    %cst_44 = arith.constant dense<0.000000e+00> : vector<2x32xf32>
    %87 = tpu.matmul %83, %47, %cst_44 {dimension_numbers = #tpu.dot_dimension_numbers<[1], [0], [0], [1], [0, 0, 1, 1], [], []>} : vector<2x32xf32>, vector<32x32xf32>, vector<2x32xf32> -> vector<2x32xf32>
    %88 = arith.addf %86, %87 : vector<2x32xf32>
    %89 = math.tanh %88 : vector<2x32xf32>
    %90 = math.tanh %89 : vector<2x32xf32>
    %c0_45 = arith.constant 0 : index
    %c192 = arith.constant 192 : index
    %91 = vector.load %arg12[%c0_45, %c192] : memref<2x256xf32, #tpu.memory_space<vmem>>, vector<2x32xf32>
    tpu.vector_store %arg12[%c0_45, %c192], %90 {strides = array<i32>} : memref<2x256xf32, #tpu.memory_space<vmem>>, vector<2x32xf32>,
    %92 = vector.extract_strided_slice %51 {offsets = [14, 0], sizes = [2, 32], strides = [1, 1]} : vector<16x32xf32> to vector<2x32xf32>
    %cst_46 = arith.constant dense<0.000000e+00> : vector<2x32xf32>
    %93 = tpu.matmul %89, %47, %cst_46 {dimension_numbers = #tpu.dot_dimension_numbers<[1], [0], [0], [1], [0, 0, 1, 1], [], []>} : vector<2x32xf32>, vector<32x32xf32>, vector<2x32xf32> -> vector<2x32xf32>
    %94 = arith.addf %92, %93 : vector<2x32xf32>
    %95 = math.tanh %94 : vector<2x32xf32>
    %96 = math.tanh %95 : vector<2x32xf32>
    %c0_47 = arith.constant 0 : index
    %c224 = arith.constant 224 : index
    %97 = vector.load %arg12[%c0_47, %c224] : memref<2x256xf32, #tpu.memory_space<vmem>>, vector<2x32xf32>
    tpu.vector_store %arg12[%c0_47, %c224], %96 {strides = array<i32>} : memref<2x256xf32, #tpu.memory_space<vmem>>, vector<2x32xf32>,
    %c0_48 = arith.constant 0 : index
    %c0_49 = arith.constant 0 : index
    %98 = vector.load %arg12[%c0_48, %c0_49] : memref<2x256xf32, #tpu.memory_space<vmem>>, vector<2x256xf32>
    %c0_50 = arith.constant 0 : index
    %c0_51 = arith.constant 0 : index
    %99 = vector.load %arg8[%c0_50, %c0_51] : memref<256x4xf32, #tpu.memory_space<vmem>>, vector<256x4xf32>
    %cst_52 = arith.constant dense<0.000000e+00> : vector<2x4xf32>
    %100 = tpu.matmul %98, %99, %cst_52 {dimension_numbers = #tpu.dot_dimension_numbers<[1], [0], [0], [1], [0, 0, 1, 1], [], []>} : vector<2x256xf32>, vector<256x4xf32>, vector<2x4xf32> -> vector<2x4xf32>
    %c0_53 = arith.constant 0 : index
    %c0_54 = arith.constant 0 : index
    %101 = vector.load %arg9[%c0_53, %c0_54] : memref<1x4xf32, #tpu.memory_space<vmem>>, vector<1x4xf32>
    %102 = vector.broadcast %101 : vector<1x4xf32> to vector<2x4xf32>
    %103 = arith.addf %100, %102 : vector<2x4xf32>
    %c0_55 = arith.constant 0 : index
    %c0_56 = arith.constant 0 : index
    %104 = vector.load %arg10[%c0_55, %c0_56] : memref<2x4xf32, #tpu.memory_space<vmem>>, vector<2x4xf32>
    tpu.vector_store %arg10[%c0_55, %c0_56], %103 {strides = array<i32>} : memref<2x4xf32, #tpu.memory_space<vmem>>, vector<2x4xf32>,
    return
  }
  func.func @transform_0(%arg0: i32) -> (i32, i32) {
    %c0_i32 = arith.constant 0 : i32
    %c0_i32_0 = arith.constant 0 : i32
    %c0_i32_1 = arith.constant 0 : i32
    return %c0_i32, %c0_i32_0 : i32, i32
  }
  func.func @transform_1(%arg0: i32) -> (i32, i32) {
    %c0_i32 = arith.constant 0 : i32
    %c0_i32_0 = arith.constant 0 : i32
    %c0_i32_1 = arith.constant 0 : i32
    return %c0_i32, %c0_i32_0 : i32, i32
  }
  func.func @transform_2(%arg0: i32) -> (i32, i32) {
    %c0_i32 = arith.constant 0 : i32
    %c0_i32_0 = arith.constant 0 : i32
    %c0_i32_1 = arith.constant 0 : i32
    return %c0_i32, %c0_i32_0 : i32, i32
  }
  func.func @transform_3(%arg0: i32) -> (i32, i32) {
    %c0_i32 = arith.constant 0 : i32
    %c0_i32_0 = arith.constant 0 : i32
    %c0_i32_1 = arith.constant 0 : i32
    return %c0_i32, %c0_i32_0 : i32, i32
  }
  func.func @transform_4(%arg0: i32) -> (i32, i32) {
    %c0_i32 = arith.constant 0 : i32
    %c0_i32_0 = arith.constant 0 : i32
    %c0_i32_1 = arith.constant 0 : i32
    return %c0_i32, %c0_i32_0 : i32, i32
  }
  func.func @transform_5(%arg0: i32) -> (i32, i32) {
    %c0_i32 = arith.constant 0 : i32
    %c0_i32_0 = arith.constant 0 : i32
    %c0_i32_1 = arith.constant 0 : i32
    return %c0_i32, %c0_i32_0 : i32, i32
  }
  func.func @transform_6(%arg0: i32) -> (i32, i32) {
    %c0_i32 = arith.constant 0 : i32
    %c0_i32_0 = arith.constant 0 : i32
    %c0_i32_1 = arith.constant 0 : i32
    return %c0_i32, %c0_i32_0 : i32, i32
  }
  func.func @transform_7(%arg0: i32) -> (i32, i32) {
    %c0_i32 = arith.constant 0 : i32
    %c0_i32_0 = arith.constant 0 : i32
    %c0_i32_1 = arith.constant 0 : i32
    return %c0_i32, %c0_i32_0 : i32, i32
  }
  func.func @transform_8(%arg0: i32) -> (i32, i32) {
    %c0_i32 = arith.constant 0 : i32
    %c0_i32_0 = arith.constant 0 : i32
    %c0_i32_1 = arith.constant 0 : i32
    return %c0_i32, %c0_i32_0 : i32, i32
  }
  func.func @transform_9(%arg0: i32) -> (i32, i32) {
    %c0_i32 = arith.constant 0 : i32
    %c0_i32_0 = arith.constant 0 : i32
    %c0_i32_1 = arith.constant 0 : i32
    return %c0_i32, %c0_i32_0 : i32, i32
  }
}

</mosaic_0001>

<llo_original>
// kernel: tpu_custom_call.1
$region0: #{tpu_custom_call.1}
  #allocation0 [shape = 'u32[]', space=smem, size = 0x4, offset = 0x4, fixed_abs, tag = 'smem constant byte address 0x4 - core index']
  #allocation1 [shape = 'u32[144,128]{1,0:T(1,128)}', space=vmem, size = 0x12000, scoped, tag = 'internal scratch']
  #allocation2 [shape = 'f32[16,32]{1,0:T(8,128)}', space=vmem, size = 0x2000, scoped, tag = 'scratch operand']
  #allocation3 [shape = 'f32[2,256]{1,0:T(2,128)}', space=vmem, size = 0x800, scoped, tag = 'scratch operand']
  %s0 = inlined_call_operand.vmem [shape: f32[16,4], index: 0, kind: input, shape index: {}]
  %s1 = inlined_call_operand.vmem [shape: f32[4,32], index: 1, kind: input, shape index: {}]
  %s2 = inlined_call_operand.vmem [shape: f32[32,32], index: 2, kind: input, shape index: {}]
  %s3 = inlined_call_operand.vmem [shape: f32[1,32], index: 3, kind: input, shape index: {}]
  %s4 = inlined_call_operand.vmem [shape: f32[32,32], index: 4, kind: input, shape index: {}]
  %s5 = inlined_call_operand.vmem [shape: f32[32,32], index: 5, kind: input, shape index: {}]
  %s6 = inlined_call_operand.vmem [shape: f32[1,32], index: 6, kind: input, shape index: {}]
  %s7 = inlined_call_operand.vmem [shape: f32[256,4], index: 7, kind: input, shape index: {}]
  %s8 = inlined_call_operand.vmem [shape: f32[1,4], index: 8, kind: input, shape index: {}]
  %s9 = inlined_call_operand.hbm [shape: f32[2,4], index: 9, kind: output, shape index: {}]
  %s10 = sld [smem:[#allocation0]]
  $region46: #{tpu_custom_call.1} parent=0
    _
  %s12 = ssub.s32 1, %s10
  %s13 = scalar_select 0, %s12, %s10
  $region1: #{tpu_custom_call.1} parent=0
    #allocation4 [shape = 'u8[1024]{0}', space=vmem, size = 0x400, scoped, tag = 'output window, operand 0, single buffered']
    #allocation5 [shape = 's32[1]{0}', space=sflag, size = 0x4, scoped, tag = 'scoped memory for tpu_custom_call.1']
    %14 = vsyncpa [#allocation5], 0
    // Predicated region
    $region2: #{tpu_custom_call.1} parent=1 // pred_check
      _
    $region3: #{tpu_custom_call.1} parent=1 // pred_check_branch
      %16 = sbr.rel (0) target = $region5
    $region4: #{tpu_custom_call.1} parent=1 // pred_region
      _
    $region5: #{tpu_custom_call.1} parent=1 // pred_fallthru
      _
    // Predicated region
    $region6: #{tpu_custom_call.1} parent=1 // pred_check
      _
    $region7: #{tpu_custom_call.1} parent=1 // pred_check_branch
      %18 = sbr.rel (0) target = $region9
    $region8: #{tpu_custom_call.1} parent=1 // pred_region
      _
    $region9: #{tpu_custom_call.1} parent=1 // pred_fallthru
      _
    // Predicated region
    $region10: #{tpu_custom_call.1} parent=1 // pred_check
      _
    $region11: #{tpu_custom_call.1} parent=1 // pred_check_branch
      %20 = sbr.rel (0) target = $region13
    $region12: #{tpu_custom_call.1} parent=1 // pred_region
      _
    $region13: #{tpu_custom_call.1} parent=1 // pred_fallthru
      _
    // Predicated region
    $region14: #{tpu_custom_call.1} parent=1 // pred_check
      _
    $region15: #{tpu_custom_call.1} parent=1 // pred_check_branch
      %22 = sbr.rel (0) target = $region17
    $region16: #{tpu_custom_call.1} parent=1 // pred_region
      _
    $region17: #{tpu_custom_call.1} parent=1 // pred_fallthru
      _
    // Predicated region
    $region18: #{tpu_custom_call.1} parent=1 // pred_check
      _
    $region19: #{tpu_custom_call.1} parent=1 // pred_check_branch
      %24 = sbr.rel (0) target = $region21
    $region20: #{tpu_custom_call.1} parent=1 // pred_region
      _
    $region21: #{tpu_custom_call.1} parent=1 // pred_fallthru
      _
    // Predicated region
    $region22: #{tpu_custom_call.1} parent=1 // pred_check
      _
    $region23: #{tpu_custom_call.1} parent=1 // pred_check_branch
      %26 = sbr.rel (0) target = $region25
    $region24: #{tpu_custom_call.1} parent=1 // pred_region
      _
    $region25: #{tpu_custom_call.1} parent=1 // pred_fallthru
      _
    // Predicated region
    $region26: #{tpu_custom_call.1} parent=1 // pred_check
      _
    $region27: #{tpu_custom_call.1} parent=1 // pred_check_branch
      %28 = sbr.rel (0) target = $region29
    $region28: #{tpu_custom_call.1} parent=1 // pred_region
      _
    $region29: #{tpu_custom_call.1} parent=1 // pred_fallthru
      _
    // Predicated region
    $region30: #{tpu_custom_call.1} parent=1 // pred_check
      _
    $region31: #{tpu_custom_call.1} parent=1 // pred_check_branch
      %30 = sbr.rel (0) target = $region33
    $region32: #{tpu_custom_call.1} parent=1 // pred_region
      _
    $region33: #{tpu_custom_call.1} parent=1 // pred_fallthru
      _
    // Predicated region
    $region34: #{tpu_custom_call.1} parent=1 // pred_check
      _
    $region35: #{tpu_custom_call.1} parent=1 // pred_check_branch
      %32 = sbr.rel (0) target = $region37
    $region36: #{tpu_custom_call.1} parent=1 // pred_region
      _
    $region37: #{tpu_custom_call.1} parent=1 // pred_fallthru
      _
    %v33 = vld [vmem:[%s0] sm:$0xff]
    %v34 = vld [vmem:[%s0 + $0x8] sm:$0xff]
    %v35 = vld [vmem:[%s1] sm:$0xf]
    %v36 = vld [vmem:[%s2] sm:$0xff]
    %v37 = vld [vmem:[%s2 + $0x8] sm:$0xff]
    %v38 = vld [vmem:[%s2 + $0x10] sm:$0xff]
    %v39 = vld [vmem:[%s2 + $0x18] sm:$0xff]
    %v40 = vld [vmem:[%s3] sm:$0x1]
    %v42 = vlaneseq
    %v43 = vshrl.u32 %v42, 7
    %v44 = vsub.s32 0, %v43
    %v45 = vrot.slane %v40, %v44
    %vm47 = vcmask 31744
    %v49 = vsel %vm47, %v33, 0
    %v52 = vsel %vm47, %v34, 0
    %vm54 = vcmask 1043456
    %v56 = vsel %vm54, %v35, 0
    %58 = vmatprep.subr.mxu0 0.0
    %59 = vmatpush1.msra.mxu0 0.0
    %60 = vmatprep.subr.mxu0 0.0
    %61 = vmatpush1.msra.mxu0 0.0
    %62 = vmatprep.subr.mxu0 0.0
    %63 = vmatpush1.msra.mxu0 0.0
    %64 = vmatprep.subr.mxu0 0.0
    %65 = vmatpush1.msra.mxu0 0.0
    %66 = vmatprep.subr.mxu0 0.0
    %67 = vmatpush1.msra.mxu0 0.0
    %68 = vmatprep.subr.mxu0 0.0
    %69 = vmatpush1.msra.mxu0 0.0
    %70 = vmatprep.subr.mxu0 0.0
    %71 = vmatpush1.msra.mxu0 0.0
    %72 = vmatprep.subr.mxu0 0.0
    %73 = vmatpush1.msra.mxu0 0.0
    %74 = vmatprep.subr.mxu0 0.0
    %75 = vmatpush1.msra.mxu0 0.0
    %76 = vmatprep.subr.mxu0 0.0
    %77 = vmatpush1.msra.mxu0 0.0
    %78 = vmatprep.subr.mxu0 0.0
    %79 = vmatpush1.msra.mxu0 0.0
    %80 = vmatprep.subr.mxu0 0.0
    %81 = vmatpush1.msra.mxu0 0.0
    %82 = vmatprep.subr.mxu0 0.0
    %83 = vmatpush1.msra.mxu0 0.0
    %84 = vmatprep.subr.mxu0 0.0
    %85 = vmatpush1.msra.mxu0 0.0
    %86 = vmatprep.subr.mxu0 0.0
    %87 = vmatpush1.msra.mxu0 0.0
    %88 = vmatprep.subr.mxu0 0.0
    %89 = vmatpush1.msra.mxu0 %v56
    %90 = vmatprep.subr.mxu0 0.0
    %91 = vmatpush2.msra.mxu0 0.0
    %92 = vmatprep.subr.mxu0 0.0
    %93 = vmatpush2.msra.mxu0 0.0
    %94 = vmatprep.subr.mxu0 0.0
    %95 = vmatpush2.msra.mxu0 0.0
    %96 = vmatprep.subr.mxu0 0.0
    %97 = vmatpush2.msra.mxu0 0.0
    %98 = vmatprep.subr.mxu0 0.0
    %99 = vmatpush2.msra.mxu0 0.0
    %100 = vmatprep.subr.mxu0 0.0
    %101 = vmatpush2.msra.mxu0 0.0
    %102 = vmatprep.subr.mxu0 0.0
    %103 = vmatpush2.msra.mxu0 0.0
    %104 = vmatprep.subr.mxu0 0.0
    %105 = vmatpush2.msra.mxu0 0.0
    %106 = vmatprep.subr.mxu0 0.0
    %107 = vmatpush2.msra.mxu0 0.0
    %108 = vmatprep.subr.mxu0 0.0
    %109 = vmatpush2.msra.mxu0 0.0
    %110 = vmatprep.subr.mxu0 0.0
    %111 = vmatpush2.msra.mxu0 0.0
    %112 = vmatprep.subr.mxu0 0.0
    %113 = vmatpush2.msra.mxu0 0.0
    %114 = vmatprep.subr.mxu0 0.0
    %115 = vmatpush2.msra.mxu0 0.0
    %116 = vmatprep.subr.mxu0 0.0
    %117 = vmatpush2.msra.mxu0 0.0
    %118 = vmatprep.subr.mxu0 0.0
    %119 = vmatpush2.msra.mxu0 0.0
    %120 = vmatprep.subr.mxu0 0.0
    %121 = vmatpush2.msra.mxu0 0.0
    %122 = vmatprep.mubr.f32.mxu0 0.0
    %123 = vmatmul.mubr.f32.gmra.mxu0 %v49
    %v124 = vpop.f32.mrf.mxu0
    %v125 = vadd.f32 %v45, %v124
    %v126 = vpop.f32.mrf.mxu0
    %127 = vmatprep.mubr.f32.mxu0 0.0
    %128 = vmatmul.mubr.f32.gmra.mxu0 %v52
    %v129 = vpop.f32.mrf.mxu0
    %v130 = vadd.f32 %v45, %v129
    %v131 = vpop.f32.mrf.mxu0
    %132 = vdwg.mxu0
    %v133 = vtanh.pop %v125
    %vm134 = vcmask 254976
    %135 = vst.msk [vmem:[#allocation2] sm:$0x3] %vm134, %v133
    %vm136 = vcmask 261120
    %v138 = vsel %vm136, %v133, 0
    %140 = vmatprep.subr.mxu0 0.0
    %141 = vmatpush1.msra.mxu0 0.0
    %142 = vmatprep.subr.mxu0 0.0
    %143 = vmatpush1.msra.mxu0 0.0
    %144 = vmatprep.subr.mxu0 0.0
    %145 = vmatpush1.msra.mxu0 0.0
    %146 = vmatprep.subr.mxu0 0.0
    %147 = vmatpush1.msra.mxu0 0.0
    %148 = vmatprep.subr.mxu0 0.0
    %149 = vmatpush1.msra.mxu0 0.0
    %150 = vmatprep.subr.mxu0 0.0
    %151 = vmatpush1.msra.mxu0 0.0
    %152 = vmatprep.subr.mxu0 0.0
    %153 = vmatpush1.msra.mxu0 0.0
    %154 = vmatprep.subr.mxu0 0.0
    %155 = vmatpush1.msra.mxu0 0.0
    %156 = vmatprep.subr.mxu0 0.0
    %157 = vmatpush1.msra.mxu0 0.0
    %158 = vmatprep.subr.mxu0 0.0
    %159 = vmatpush1.msra.mxu0 0.0
    %160 = vmatprep.subr.mxu0 0.0
    %161 = vmatpush1.msra.mxu0 0.0
    %162 = vmatprep.subr.mxu0 0.0
    %163 = vmatpush1.msra.mxu0 0.0
    %164 = vmatprep.subr.mxu0 0.0
    %165 = vmatpush1.msra.mxu0 %v39
    %166 = vmatprep.subr.mxu0 0.0
    %167 = vmatpush1.msra.mxu0 %v38
    %168 = vmatprep.subr.mxu0 0.0
    %169 = vmatpush1.msra.mxu0 %v37
    %170 = vmatprep.subr.mxu0 0.0
    %171 = vmatpush1.msra.mxu0 %v36
    %172 = vmatprep.subr.mxu0 0.0
    %173 = vmatpush2.msra.mxu0 0.0
    %174 = vmatprep.subr.mxu0 0.0
    %175 = vmatpush2.msra.mxu0 0.0
    %176 = vmatprep.subr.mxu0 0.0
    %177 = vmatpush2.msra.mxu0 0.0
    %178 = vmatprep.subr.mxu0 0.0
    %179 = vmatpush2.msra.mxu0 0.0
    %180 = vmatprep.subr.mxu0 0.0
    %181 = vmatpush2.msra.mxu0 0.0
    %182 = vmatprep.subr.mxu0 0.0
    %183 = vmatpush2.msra.mxu0 0.0
    %184 = vmatprep.subr.mxu0 0.0
    %185 = vmatpush2.msra.mxu0 0.0
    %186 = vmatprep.subr.mxu0 0.0
    %187 = vmatpush2.msra.mxu0 0.0
    %188 = vmatprep.subr.mxu0 0.0
    %189 = vmatpush2.msra.mxu0 0.0
    %190 = vmatprep.subr.mxu0 0.0
    %191 = vmatpush2.msra.mxu0 0.0
    %192 = vmatprep.subr.mxu0 0.0
    %193 = vmatpush2.msra.mxu0 0.0
    %194 = vmatprep.subr.mxu0 0.0
    %195 = vmatpush2.msra.mxu0 0.0
    %196 = vmatprep.subr.mxu0 0.0
    %197 = vmatpush2.msra.mxu0 0.0
    %198 = vmatprep.subr.mxu0 0.0
    %199 = vmatpush2.msra.mxu0 0.0
    %200 = vmatprep.subr.mxu0 0.0
    %201 = vmatpush2.msra.mxu0 0.0
    %202 = vmatprep.subr.mxu0 0.0
    %203 = vmatpush2.msra.mxu0 0.0
    %204 = vmatprep.mubr.f32.mxu0 0.0
    %205 = vmatmul.mubr.f32.gmra.mxu0 %v138
    %v206 = vpop.f32.mrf.mxu0
    %v207 = vadd.f32 0.0, %v206
    %v208 = vpop.f32.mrf.mxu0
    %209 = vdwg.mxu0
    %v211 = vrot.slane %v207, 6
    %v213 = vadd.f32 %v125, %v211
    %v214 = vtanh.pop %v213
    %vm215 = vcmask 257026
    %216 = vst.msk [vmem:[#allocation2] sm:$0xc] %vm215, %v214
    %v218 = vrot.slane %v214, 2
    %v219 = vsel %vm136, %v218, 0
    %221 = vmatprep.subr.mxu0 0.0
    %222 = vmatpush1.msra.mxu0 0.0
    %223 = vmatprep.subr.mxu0 0.0
    %224 = vmatpush1.msra.mxu0 0.0
    %225 = vmatprep.subr.mxu0 0.0
    %226 = vmatpush1.msra.mxu0 0.0
    %227 = vmatprep.subr.mxu0 0.0
    %228 = vmatpush1.msra.mxu0 0.0
    %229 = vmatprep.subr.mxu0 0.0
    %230 = vmatpush1.msra.mxu0 0.0
    %231 = vmatprep.subr.mxu0 0.0
    %232 = vmatpush1.msra.mxu0 0.0
    %233 = vmatprep.subr.mxu0 0.0
    %234 = vmatpush1.msra.mxu0 0.0
    %235 = vmatprep.subr.mxu0 0.0
    %236 = vmatpush1.msra.mxu0 0.0
    %237 = vmatprep.subr.mxu0 0.0
    %238 = vmatpush1.msra.mxu0 0.0
    %239 = vmatprep.subr.mxu0 0.0
    %240 = vmatpush1.msra.mxu0 0.0
    %241 = vmatprep.subr.mxu0 0.0
    %242 = vmatpush1.msra.mxu0 0.0
    %243 = vmatprep.subr.mxu0 0.0
    %244 = vmatpush1.msra.mxu0 0.0
    %245 = vmatprep.subr.mxu0 0.0
    %246 = vmatpush1.msra.mxu0 %v39
    %247 = vmatprep.subr.mxu0 0.0
    %248 = vmatpush1.msra.mxu0 %v38
    %249 = vmatprep.subr.mxu0 0.0
    %250 = vmatpush1.msra.mxu0 %v37
    %251 = vmatprep.subr.mxu0 0.0
    %252 = vmatpush1.msra.mxu0 %v36
    %253 = vmatprep.subr.mxu0 0.0
    %254 = vmatpush2.msra.mxu0 0.0
    %255 = vmatprep.subr.mxu0 0.0
    %256 = vmatpush2.msra.mxu0 0.0
    %257 = vmatprep.subr.mxu0 0.0
    %258 = vmatpush2.msra.mxu0 0.0
    %259 = vmatprep.subr.mxu0 0.0
    %260 = vmatpush2.msra.mxu0 0.0
    %261 = vmatprep.subr.mxu0 0.0
    %262 = vmatpush2.msra.mxu0 0.0
    %263 = vmatprep.subr.mxu0 0.0
    %264 = vmatpush2.msra.mxu0 0.0
    %265 = vmatprep.subr.mxu0 0.0
    %266 = vmatpush2.msra.mxu0 0.0
    %267 = vmatprep.subr.mxu0 0.0
    %268 = vmatpush2.msra.mxu0 0.0
    %269 = vmatprep.subr.mxu0 0.0
    %270 = vmatpush2.msra.mxu0 0.0
    %271 = vmatprep.subr.mxu0 0.0
    %272 = vmatpush2.msra.mxu0 0.0
    %273 = vmatprep.subr.mxu0 0.0
    %274 = vmatpush2.msra.mxu0 0.0
    %275 = vmatprep.subr.mxu0 0.0
    %276 = vmatpush2.msra.mxu0 0.0
    %277 = vmatprep.subr.mxu0 0.0
    %278 = vmatpush2.msra.mxu0 0.0
    %279 = vmatprep.subr.mxu0 0.0
    %280 = vmatpush2.msra.mxu0 0.0
    %281 = vmatprep.subr.mxu0 0.0
    %282 = vmatpush2.msra.mxu0 0.0
    %283 = vmatprep.subr.mxu0 0.0
    %284 = vmatpush2.msra.mxu0 0.0
    %285 = vmatprep.mubr.f32.mxu0 0.0
    %286 = vmatmul.mubr.f32.gmra.mxu0 %v219
    %v287 = vpop.f32.mrf.mxu0
    %v288 = vadd.f32 0.0, %v287
    %v289 = vpop.f32.mrf.mxu0
    %290 = vdwg.mxu0
    %v292 = vrot.slane %v288, 4
    %v294 = vadd.f32 %v125, %v292
    %v295 = vtanh.pop %v294
    %vm296 = vcmask 259076
    %297 = vst.msk [vmem:[#allocation2] sm:$0x30] %vm296, %v295
    %v299 = vrot.slane %v295, 4
    %v300 = vsel %vm136, %v299, 0
    %302 = vmatprep.subr.mxu0 0.0
    %303 = vmatpush1.msra.mxu0 0.0
    %304 = vmatprep.subr.mxu0 0.0
    %305 = vmatpush1.msra.mxu0 0.0
    %306 = vmatprep.subr.mxu0 0.0
    %307 = vmatpush1.msra.mxu0 0.0
    %308 = vmatprep.subr.mxu0 0.0
    %309 = vmatpush1.msra.mxu0 0.0
    %310 = vmatprep.subr.mxu0 0.0
    %311 = vmatpush1.msra.mxu0 0.0
    %312 = vmatprep.subr.mxu0 0.0
    %313 = vmatpush1.msra.mxu0 0.0
    %314 = vmatprep.subr.mxu0 0.0
    %315 = vmatpush1.msra.mxu0 0.0
    %316 = vmatprep.subr.mxu0 0.0
    %317 = vmatpush1.msra.mxu0 0.0
    %318 = vmatprep.subr.mxu0 0.0
    %319 = vmatpush1.msra.mxu0 0.0
    %320 = vmatprep.subr.mxu0 0.0
    %321 = vmatpush1.msra.mxu0 0.0
    %322 = vmatprep.subr.mxu0 0.0
    %323 = vmatpush1.msra.mxu0 0.0
    %324 = vmatprep.subr.mxu0 0.0
    %325 = vmatpush1.msra.mxu0 0.0
    %326 = vmatprep.subr.mxu0 0.0
    %327 = vmatpush1.msra.mxu0 %v39
    %328 = vmatprep.subr.mxu0 0.0
    %329 = vmatpush1.msra.mxu0 %v38
    %330 = vmatprep.subr.mxu0 0.0
    %331 = vmatpush1.msra.mxu0 %v37
    %332 = vmatprep.subr.mxu0 0.0
    %333 = vmatpush1.msra.mxu0 %v36
    %334 = vmatprep.subr.mxu0 0.0
    %335 = vmatpush2.msra.mxu0 0.0
    %336 = vmatprep.subr.mxu0 0.0
    %337 = vmatpush2.msra.mxu0 0.0
    %338 = vmatprep.subr.mxu0 0.0
    %339 = vmatpush2.msra.mxu0 0.0
    %340 = vmatprep.subr.mxu0 0.0
    %341 = vmatpush2.msra.mxu0 0.0
    %342 = vmatprep.subr.mxu0 0.0
    %343 = vmatpush2.msra.mxu0 0.0
    %344 = vmatprep.subr.mxu0 0.0
    %345 = vmatpush2.msra.mxu0 0.0
    %346 = vmatprep.subr.mxu0 0.0
    %347 = vmatpush2.msra.mxu0 0.0
    %348 = vmatprep.subr.mxu0 0.0
    %349 = vmatpush2.msra.mxu0 0.0
    %350 = vmatprep.subr.mxu0 0.0
    %351 = vmatpush2.msra.mxu0 0.0
    %352 = vmatprep.subr.mxu0 0.0
    %353 = vmatpush2.msra.mxu0 0.0
    %354 = vmatprep.subr.mxu0 0.0
    %355 = vmatpush2.msra.mxu0 0.0
    %356 = vmatprep.subr.mxu0 0.0
    %357 = vmatpush2.msra.mxu0 0.0
    %358 = vmatprep.subr.mxu0 0.0
    %359 = vmatpush2.msra.mxu0 0.0
    %360 = vmatprep.subr.mxu0 0.0
    %361 = vmatpush2.msra.mxu0 0.0
    %362 = vmatprep.subr.mxu0 0.0
    %363 = vmatpush2.msra.mxu0 0.0
    %364 = vmatprep.subr.mxu0 0.0
    %365 = vmatpush2.msra.mxu0 0.0
    %366 = vmatprep.mubr.f32.mxu0 0.0
    %367 = vmatmul.mubr.f32.gmra.mxu0 %v300
    %v368 = vpop.f32.mrf.mxu0
    %v369 = vadd.f32 0.0, %v368
    %v370 = vpop.f32.mrf.mxu0
    %371 = vdwg.mxu0
    %v373 = vrot.slane %v369, 2
    %v375 = vadd.f32 %v125, %v373
    %v376 = vtanh.pop %v375
    %vm377 = vcmask 261126
    %378 = vst.msk [vmem:[#allocation2] sm:$0xc0] %vm377, %v376
    %v380 = vrot.slane %v376, 6
    %v381 = vsel %vm136, %v380, 0
    %383 = vmatprep.subr.mxu0 0.0
    %384 = vmatpush1.msra.mxu0 0.0
    %385 = vmatprep.subr.mxu0 0.0
    %386 = vmatpush1.msra.mxu0 0.0
    %387 = vmatprep.subr.mxu0 0.0
    %388 = vmatpush1.msra.mxu0 0.0
    %389 = vmatprep.subr.mxu0 0.0
    %390 = vmatpush1.msra.mxu0 0.0
    %391 = vmatprep.subr.mxu0 0.0
    %392 = vmatpush1.msra.mxu0 0.0
    %393 = vmatprep.subr.mxu0 0.0
    %394 = vmatpush1.msra.mxu0 0.0
    %395 = vmatprep.subr.mxu0 0.0
    %396 = vmatpush1.msra.mxu0 0.0
    %397 = vmatprep.subr.mxu0 0.0
    %398 = vmatpush1.msra.mxu0 0.0
    %399 = vmatprep.subr.mxu0 0.0
    %400 = vmatpush1.msra.mxu0 0.0
    %401 = vmatprep.subr.mxu0 0.0
    %402 = vmatpush1.msra.mxu0 0.0
    %403 = vmatprep.subr.mxu0 0.0
    %404 = vmatpush1.msra.mxu0 0.0
    %405 = vmatprep.subr.mxu0 0.0
    %406 = vmatpush1.msra.mxu0 0.0
    %407 = vmatprep.subr.mxu0 0.0
    %408 = vmatpush1.msra.mxu0 %v39
    %409 = vmatprep.subr.mxu0 0.0
    %410 = vmatpush1.msra.mxu0 %v38
    %411 = vmatprep.subr.mxu0 0.0
    %412 = vmatpush1.msra.mxu0 %v37
    %413 = vmatprep.subr.mxu0 0.0
    %414 = vmatpush1.msra.mxu0 %v36
    %415 = vmatprep.subr.mxu0 0.0
    %416 = vmatpush2.msra.mxu0 0.0
    %417 = vmatprep.subr.mxu0 0.0
    %418 = vmatpush2.msra.mxu0 0.0
    %419 = vmatprep.subr.mxu0 0.0
    %420 = vmatpush2.msra.mxu0 0.0
    %421 = vmatprep.subr.mxu0 0.0
    %422 = vmatpush2.msra.mxu0 0.0
    %423 = vmatprep.subr.mxu0 0.0
    %424 = vmatpush2.msra.mxu0 0.0
    %425 = vmatprep.subr.mxu0 0.0
    %426 = vmatpush2.msra.mxu0 0.0
    %427 = vmatprep.subr.mxu0 0.0
    %428 = vmatpush2.msra.mxu0 0.0
    %429 = vmatprep.subr.mxu0 0.0
    %430 = vmatpush2.msra.mxu0 0.0
    %431 = vmatprep.subr.mxu0 0.0
    %432 = vmatpush2.msra.mxu0 0.0
    %433 = vmatprep.subr.mxu0 0.0
    %434 = vmatpush2.msra.mxu0 0.0
    %435 = vmatprep.subr.mxu0 0.0
    %436 = vmatpush2.msra.mxu0 0.0
    %437 = vmatprep.subr.mxu0 0.0
    %438 = vmatpush2.msra.mxu0 0.0
    %439 = vmatprep.subr.mxu0 0.0
    %440 = vmatpush2.msra.mxu0 0.0
    %441 = vmatprep.subr.mxu0 0.0
    %442 = vmatpush2.msra.mxu0 0.0
    %443 = vmatprep.subr.mxu0 0.0
    %444 = vmatpush2.msra.mxu0 0.0
    %445 = vmatprep.subr.mxu0 0.0
    %446 = vmatpush2.msra.mxu0 0.0
    %447 = vmatprep.mubr.f32.mxu0 0.0
    %448 = vmatmul.mubr.f32.gmra.mxu0 %v381
    %v449 = vpop.f32.mrf.mxu0
    %v450 = vadd.f32 0.0, %v449
    %v451 = vpop.f32.mrf.mxu0
    %452 = vdwg.mxu0
    %v453 = vadd.f32 %v130, %v450
    %v454 = vtanh.pop %v453
    %455 = vst.msk [vmem:[#allocation2 + $0x8] sm:$0x3] %vm134, %v454
    %v457 = vsel %vm136, %v454, 0
    %459 = vmatprep.subr.mxu0 0.0
    %460 = vmatpush1.msra.mxu0 0.0
    %461 = vmatprep.subr.mxu0 0.0
    %462 = vmatpush1.msra.mxu0 0.0
    %463 = vmatprep.subr.mxu0 0.0
    %464 = vmatpush1.msra.mxu0 0.0
    %465 = vmatprep.subr.mxu0 0.0
    %466 = vmatpush1.msra.mxu0 0.0
    %467 = vmatprep.subr.mxu0 0.0
    %468 = vmatpush1.msra.mxu0 0.0
    %469 = vmatprep.subr.mxu0 0.0
    %470 = vmatpush1.msra.mxu0 0.0
    %471 = vmatprep.subr.mxu0 0.0
    %472 = vmatpush1.msra.mxu0 0.0
    %473 = vmatprep.subr.mxu0 0.0
    %474 = vmatpush1.msra.mxu0 0.0
    %475 = vmatprep.subr.mxu0 0.0
    %476 = vmatpush1.msra.mxu0 0.0
    %477 = vmatprep.subr.mxu0 0.0
    %478 = vmatpush1.msra.mxu0 0.0
    %479 = vmatprep.subr.mxu0 0.0
    %480 = vmatpush1.msra.mxu0 0.0
    %481 = vmatprep.subr.mxu0 0.0
    %482 = vmatpush1.msra.mxu0 0.0
    %483 = vmatprep.subr.mxu0 0.0
    %484 = vmatpush1.msra.mxu0 %v39
    %485 = vmatprep.subr.mxu0 0.0
    %486 = vmatpush1.msra.mxu0 %v38
    %487 = vmatprep.subr.mxu0 0.0
    %488 = vmatpush1.msra.mxu0 %v37
    %489 = vmatprep.subr.mxu0 0.0
    %490 = vmatpush1.msra.mxu0 %v36
    %491 = vmatprep.subr.mxu0 0.0
    %492 = vmatpush2.msra.mxu0 0.0
    %493 = vmatprep.subr.mxu0 0.0
    %494 = vmatpush2.msra.mxu0 0.0
    %495 = vmatprep.subr.mxu0 0.0
    %496 = vmatpush2.msra.mxu0 0.0
    %497 = vmatprep.subr.mxu0 0.0
    %498 = vmatpush2.msra.mxu0 0.0
    %499 = vmatprep.subr.mxu0 0.0
    %500 = vmatpush2.msra.mxu0 0.0
    %501 = vmatprep.subr.mxu0 0.0
    %502 = vmatpush2.msra.mxu0 0.0
    %503 = vmatprep.subr.mxu0 0.0
    %504 = vmatpush2.msra.mxu0 0.0
    %505 = vmatprep.subr.mxu0 0.0
    %506 = vmatpush2.msra.mxu0 0.0
    %507 = vmatprep.subr.mxu0 0.0
    %508 = vmatpush2.msra.mxu0 0.0
    %509 = vmatprep.subr.mxu0 0.0
    %510 = vmatpush2.msra.mxu0 0.0
    %511 = vmatprep.subr.mxu0 0.0
    %512 = vmatpush2.msra.mxu0 0.0
    %513 = vmatprep.subr.mxu0 0.0
    %514 = vmatpush2.msra.mxu0 0.0
    %515 = vmatprep.subr.mxu0 0.0
    %516 = vmatpush2.msra.mxu0 0.0
    %517 = vmatprep.subr.mxu0 0.0
    %518 = vmatpush2.msra.mxu0 0.0
    %519 = vmatprep.subr.mxu0 0.0
    %520 = vmatpush2.msra.mxu0 0.0
    %521 = vmatprep.subr.mxu0 0.0
    %522 = vmatpush2.msra.mxu0 0.0
    %523 = vmatprep.mubr.f32.mxu0 0.0
    %524 = vmatmul.mubr.f32.gmra.mxu0 %v457
    %v525 = vpop.f32.mrf.mxu0
    %v526 = vadd.f32 0.0, %v525
    %v527 = vpop.f32.mrf.mxu0
    %528 = vdwg.mxu0
    %v530 = vrot.slane %v526, 6
    %v532 = vadd.f32 %v130, %v530
    %v533 = vtanh.pop %v532
    %534 = vst.msk [vmem:[#allocation2 + $0x8] sm:$0xc] %vm215, %v533
    %v536 = vrot.slane %v533, 2
    %v537 = vsel %vm136, %v536, 0
    %539 = vmatprep.subr.mxu0 0.0
    %540 = vmatpush1.msra.mxu0 0.0
    %541 = vmatprep.subr.mxu0 0.0
    %542 = vmatpush1.msra.mxu0 0.0
    %543 = vmatprep.subr.mxu0 0.0
    %544 = vmatpush1.msra.mxu0 0.0
    %545 = vmatprep.subr.mxu0 0.0
    %546 = vmatpush1.msra.mxu0 0.0
    %547 = vmatprep.subr.mxu0 0.0
    %548 = vmatpush1.msra.mxu0 0.0
    %549 = vmatprep.subr.mxu0 0.0
    %550 = vmatpush1.msra.mxu0 0.0
    %551 = vmatprep.subr.mxu0 0.0
    %552 = vmatpush1.msra.mxu0 0.0
    %553 = vmatprep.subr.mxu0 0.0
    %554 = vmatpush1.msra.mxu0 0.0
    %555 = vmatprep.subr.mxu0 0.0
    %556 = vmatpush1.msra.mxu0 0.0
    %557 = vmatprep.subr.mxu0 0.0
    %558 = vmatpush1.msra.mxu0 0.0
    %559 = vmatprep.subr.mxu0 0.0
    %560 = vmatpush1.msra.mxu0 0.0
    %561 = vmatprep.subr.mxu0 0.0
    %562 = vmatpush1.msra.mxu0 0.0
    %563 = vmatprep.subr.mxu0 0.0
    %564 = vmatpush1.msra.mxu0 %v39
    %565 = vmatprep.subr.mxu0 0.0
    %566 = vmatpush1.msra.mxu0 %v38
    %567 = vmatprep.subr.mxu0 0.0
    %568 = vmatpush1.msra.mxu0 %v37
    %569 = vmatprep.subr.mxu0 0.0
    %570 = vmatpush1.msra.mxu0 %v36
    %571 = vmatprep.subr.mxu0 0.0
    %572 = vmatpush2.msra.mxu0 0.0
    %573 = vmatprep.subr.mxu0 0.0
    %574 = vmatpush2.msra.mxu0 0.0
    %575 = vmatprep.subr.mxu0 0.0
    %576 = vmatpush2.msra.mxu0 0.0
    %577 = vmatprep.subr.mxu0 0.0
    %578 = vmatpush2.msra.mxu0 0.0
    %579 = vmatprep.subr.mxu0 0.0
    %580 = vmatpush2.msra.mxu0 0.0
    %581 = vmatprep.subr.mxu0 0.0
    %582 = vmatpush2.msra.mxu0 0.0
    %583 = vmatprep.subr.mxu0 0.0
    %584 = vmatpush2.msra.mxu0 0.0
    %585 = vmatprep.subr.mxu0 0.0
    %586 = vmatpush2.msra.mxu0 0.0
    %587 = vmatprep.subr.mxu0 0.0
    %588 = vmatpush2.msra.mxu0 0.0
    %589 = vmatprep.subr.mxu0 0.0
    %590 = vmatpush2.msra.mxu0 0.0
    %591 = vmatprep.subr.mxu0 0.0
    %592 = vmatpush2.msra.mxu0 0.0
    %593 = vmatprep.subr.mxu0 0.0
    %594 = vmatpush2.msra.mxu0 0.0
    %595 = vmatprep.subr.mxu0 0.0
    %596 = vmatpush2.msra.mxu0 0.0
    %597 = vmatprep.subr.mxu0 0.0
    %598 = vmatpush2.msra.mxu0 0.0
    %599 = vmatprep.subr.mxu0 0.0
    %600 = vmatpush2.msra.mxu0 0.0
    %601 = vmatprep.subr.mxu0 0.0
    %602 = vmatpush2.msra.mxu0 0.0
    %603 = vmatprep.mubr.f32.mxu0 0.0
    %604 = vmatmul.mubr.f32.gmra.mxu0 %v537
    %v605 = vpop.f32.mrf.mxu0
    %v606 = vadd.f32 0.0, %v605
    %v607 = vpop.f32.mrf.mxu0
    %608 = vdwg.mxu0
    %v610 = vrot.slane %v606, 4
    %v612 = vadd.f32 %v130, %v610
    %v613 = vtanh.pop %v612
    %614 = vst.msk [vmem:[#allocation2 + $0x8] sm:$0x30] %vm296, %v613
    %v616 = vrot.slane %v613, 4
    %v617 = vsel %vm136, %v616, 0
    %619 = vmatprep.subr.mxu0 0.0
    %620 = vmatpush1.msra.mxu0 0.0
    %621 = vmatprep.subr.mxu0 0.0
    %622 = vmatpush1.msra.mxu0 0.0
    %623 = vmatprep.subr.mxu0 0.0
    %624 = vmatpush1.msra.mxu0 0.0
    %625 = vmatprep.subr.mxu0 0.0
    %626 = vmatpush1.msra.mxu0 0.0
    %627 = vmatprep.subr.mxu0 0.0
    %628 = vmatpush1.msra.mxu0 0.0
    %629 = vmatprep.subr.mxu0 0.0
    %630 = vmatpush1.msra.mxu0 0.0
    %631 = vmatprep.subr.mxu0 0.0
    %632 = vmatpush1.msra.mxu0 0.0
    %633 = vmatprep.subr.mxu0 0.0
    %634 = vmatpush1.msra.mxu0 0.0
    %635 = vmatprep.subr.mxu0 0.0
    %636 = vmatpush1.msra.mxu0 0.0
    %637 = vmatprep.subr.mxu0 0.0
    %638 = vmatpush1.msra.mxu0 0.0
    %639 = vmatprep.subr.mxu0 0.0
    %640 = vmatpush1.msra.mxu0 0.0
    %641 = vmatprep.subr.mxu0 0.0
    %642 = vmatpush1.msra.mxu0 0.0
    %643 = vmatprep.subr.mxu0 0.0
    %644 = vmatpush1.msra.mxu0 %v39
    %645 = vmatprep.subr.mxu0 0.0
    %646 = vmatpush1.msra.mxu0 %v38
    %647 = vmatprep.subr.mxu0 0.0
    %648 = vmatpush1.msra.mxu0 %v37
    %649 = vmatprep.subr.mxu0 0.0
    %650 = vmatpush1.msra.mxu0 %v36
    %651 = vmatprep.subr.mxu0 0.0
    %652 = vmatpush2.msra.mxu0 0.0
    %653 = vmatprep.subr.mxu0 0.0
    %654 = vmatpush2.msra.mxu0 0.0
    %655 = vmatprep.subr.mxu0 0.0
    %656 = vmatpush2.msra.mxu0 0.0
    %657 = vmatprep.subr.mxu0 0.0
    %658 = vmatpush2.msra.mxu0 0.0
    %659 = vmatprep.subr.mxu0 0.0
    %660 = vmatpush2.msra.mxu0 0.0
    %661 = vmatprep.subr.mxu0 0.0
    %662 = vmatpush2.msra.mxu0 0.0
    %663 = vmatprep.subr.mxu0 0.0
    %664 = vmatpush2.msra.mxu0 0.0
    %665 = vmatprep.subr.mxu0 0.0
    %666 = vmatpush2.msra.mxu0 0.0
    %667 = vmatprep.subr.mxu0 0.0
    %668 = vmatpush2.msra.mxu0 0.0
    %669 = vmatprep.subr.mxu0 0.0
    %670 = vmatpush2.msra.mxu0 0.0
    %671 = vmatprep.subr.mxu0 0.0
    %672 = vmatpush2.msra.mxu0 0.0
    %673 = vmatprep.subr.mxu0 0.0
    %674 = vmatpush2.msra.mxu0 0.0
    %675 = vmatprep.subr.mxu0 0.0
    %676 = vmatpush2.msra.mxu0 0.0
    %677 = vmatprep.subr.mxu0 0.0
    %678 = vmatpush2.msra.mxu0 0.0
    %679 = vmatprep.subr.mxu0 0.0
    %680 = vmatpush2.msra.mxu0 0.0
    %681 = vmatprep.subr.mxu0 0.0
    %682 = vmatpush2.msra.mxu0 0.0
    %683 = vmatprep.mubr.f32.mxu0 0.0
    %684 = vmatmul.mubr.f32.gmra.mxu0 %v617
    %v685 = vpop.f32.mrf.mxu0
    %v686 = vadd.f32 0.0, %v685
    %v687 = vpop.f32.mrf.mxu0
    %688 = vdwg.mxu0
    %v690 = vrot.slane %v686, 2
    %v692 = vadd.f32 %v130, %v690
    %v693 = vtanh.pop %v692
    %694 = vst.msk [vmem:[#allocation2 + $0x8] sm:$0xc0] %vm377, %v693
    %v695 = vld [vmem:[#allocation2] sm:$0xff]
    %v696 = vld [vmem:[#allocation2 + $0x8] sm:$0xff]
    %v697 = vld [vmem:[%s4] sm:$0xff]
    %v698 = vld [vmem:[%s4 + $0x8] sm:$0xff]
    %v699 = vld [vmem:[%s4 + $0x10] sm:$0xff]
    %v700 = vld [vmem:[%s4 + $0x18] sm:$0xff]
    %v701 = vld [vmem:[%s5] sm:$0xff]
    %v702 = vld [vmem:[%s5 + $0x8] sm:$0xff]
    %v703 = vld [vmem:[%s5 + $0x10] sm:$0xff]
    %v704 = vld [vmem:[%s5 + $0x18] sm:$0xff]
    %v705 = vld [vmem:[%s6] sm:$0x1]
    %v707 = vlaneseq
    %v708 = vshrl.u32 %v707, 7
    %v709 = vsub.s32 0, %v708
    %v710 = vrot.slane %v705, %v709
    %v713 = vsel %vm136, %v695, 0
    %v716 = vsel %vm136, %v696, 0
    %718 = vmatprep.subr.mxu0 0.0
    %719 = vmatpush1.msra.mxu0 0.0
    %720 = vmatprep.subr.mxu0 0.0
    %721 = vmatpush1.msra.mxu0 0.0
    %722 = vmatprep.subr.mxu0 0.0
    %723 = vmatpush1.msra.mxu0 0.0
    %724 = vmatprep.subr.mxu0 0.0
    %725 = vmatpush1.msra.mxu0 0.0
    %726 = vmatprep.subr.mxu0 0.0
    %727 = vmatpush1.msra.mxu0 0.0
    %728 = vmatprep.subr.mxu0 0.0
    %729 = vmatpush1.msra.mxu0 0.0
    %730 = vmatprep.subr.mxu0 0.0
    %731 = vmatpush1.msra.mxu0 0.0
    %732 = vmatprep.subr.mxu0 0.0
    %733 = vmatpush1.msra.mxu0 0.0
    %734 = vmatprep.subr.mxu0 0.0
    %735 = vmatpush1.msra.mxu0 0.0
    %736 = vmatprep.subr.mxu0 0.0
    %737 = vmatpush1.msra.mxu0 0.0
    %738 = vmatprep.subr.mxu0 0.0
    %739 = vmatpush1.msra.mxu0 0.0
    %740 = vmatprep.subr.mxu0 0.0
    %741 = vmatpush1.msra.mxu0 0.0
    %742 = vmatprep.subr.mxu0 0.0
    %743 = vmatpush1.msra.mxu0 %v700
    %744 = vmatprep.subr.mxu0 0.0
    %745 = vmatpush1.msra.mxu0 %v699
    %746 = vmatprep.subr.mxu0 0.0
    %747 = vmatpush1.msra.mxu0 %v698
    %748 = vmatprep.subr.mxu0 0.0
    %749 = vmatpush1.msra.mxu0 %v697
    %750 = vmatprep.subr.mxu0 0.0
    %751 = vmatpush2.msra.mxu0 0.0
    %752 = vmatprep.subr.mxu0 0.0
    %753 = vmatpush2.msra.mxu0 0.0
    %754 = vmatprep.subr.mxu0 0.0
    %755 = vmatpush2.msra.mxu0 0.0
    %756 = vmatprep.subr.mxu0 0.0
    %757 = vmatpush2.msra.mxu0 0.0
    %758 = vmatprep.subr.mxu0 0.0
    %759 = vmatpush2.msra.mxu0 0.0
    %760 = vmatprep.subr.mxu0 0.0
    %761 = vmatpush2.msra.mxu0 0.0
    %762 = vmatprep.subr.mxu0 0.0
    %763 = vmatpush2.msra.mxu0 0.0
    %764 = vmatprep.subr.mxu0 0.0
    %765 = vmatpush2.msra.mxu0 0.0
    %766 = vmatprep.subr.mxu0 0.0
    %767 = vmatpush2.msra.mxu0 0.0
    %768 = vmatprep.subr.mxu0 0.0
    %769 = vmatpush2.msra.mxu0 0.0
    %770 = vmatprep.subr.mxu0 0.0
    %771 = vmatpush2.msra.mxu0 0.0
    %772 = vmatprep.subr.mxu0 0.0
    %773 = vmatpush2.msra.mxu0 0.0
    %774 = vmatprep.subr.mxu0 0.0
    %775 = vmatpush2.msra.mxu0 0.0
    %776 = vmatprep.subr.mxu0 0.0
    %777 = vmatpush2.msra.mxu0 0.0
    %778 = vmatprep.subr.mxu0 0.0
    %779 = vmatpush2.msra.mxu0 0.0
    %780 = vmatprep.subr.mxu0 0.0
    %781 = vmatpush2.msra.mxu0 0.0
    %782 = vmatprep.mubr.f32.mxu0 0.0
    %783 = vmatmul.mubr.f32.gmra.mxu0 %v713
    %v784 = vpop.f32.mrf.mxu0
    %v785 = vadd.f32 %v710, %v784
    %v786 = vpop.f32.mrf.mxu0
    %787 = vmatprep.mubr.f32.mxu0 0.0
    %788 = vmatmul.mubr.f32.gmra.mxu0 %v716
    %v789 = vpop.f32.mrf.mxu0
    %v790 = vadd.f32 %v710, %v789
    %v791 = vpop.f32.mrf.mxu0
    %792 = vdwg.mxu0
    %v793 = vtanh.pop %v785
    %v794 = vtanh.pop %v793
    %795 = vst.msk [vmem:[#allocation3] sm:$0x3] %vm134, %v794
    %v797 = vsel %vm136, %v793, 0
    %799 = vmatprep.subr.mxu0 0.0
    %800 = vmatpush1.msra.mxu0 0.0
    %801 = vmatprep.subr.mxu0 0.0
    %802 = vmatpush1.msra.mxu0 0.0
    %803 = vmatprep.subr.mxu0 0.0
    %804 = vmatpush1.msra.mxu0 0.0
    %805 = vmatprep.subr.mxu0 0.0
    %806 = vmatpush1.msra.mxu0 0.0
    %807 = vmatprep.subr.mxu0 0.0
    %808 = vmatpush1.msra.mxu0 0.0
    %809 = vmatprep.subr.mxu0 0.0
    %810 = vmatpush1.msra.mxu0 0.0
    %811 = vmatprep.subr.mxu0 0.0
    %812 = vmatpush1.msra.mxu0 0.0
    %813 = vmatprep.subr.mxu0 0.0
    %814 = vmatpush1.msra.mxu0 0.0
    %815 = vmatprep.subr.mxu0 0.0
    %816 = vmatpush1.msra.mxu0 0.0
    %817 = vmatprep.subr.mxu0 0.0
    %818 = vmatpush1.msra.mxu0 0.0
    %819 = vmatprep.subr.mxu0 0.0
    %820 = vmatpush1.msra.mxu0 0.0
    %821 = vmatprep.subr.mxu0 0.0
    %822 = vmatpush1.msra.mxu0 0.0
    %823 = vmatprep.subr.mxu0 0.0
    %824 = vmatpush1.msra.mxu0 %v704
    %825 = vmatprep.subr.mxu0 0.0
    %826 = vmatpush1.msra.mxu0 %v703
    %827 = vmatprep.subr.mxu0 0.0
    %828 = vmatpush1.msra.mxu0 %v702
    %829 = vmatprep.subr.mxu0 0.0
    %830 = vmatpush1.msra.mxu0 %v701
    %831 = vmatprep.subr.mxu0 0.0
    %832 = vmatpush2.msra.mxu0 0.0
    %833 = vmatprep.subr.mxu0 0.0
    %834 = vmatpush2.msra.mxu0 0.0
    %835 = vmatprep.subr.mxu0 0.0
    %836 = vmatpush2.msra.mxu0 0.0
    %837 = vmatprep.subr.mxu0 0.0
    %838 = vmatpush2.msra.mxu0 0.0
    %839 = vmatprep.subr.mxu0 0.0
    %840 = vmatpush2.msra.mxu0 0.0
    %841 = vmatprep.subr.mxu0 0.0
    %842 = vmatpush2.msra.mxu0 0.0
    %843 = vmatprep.subr.mxu0 0.0
    %844 = vmatpush2.msra.mxu0 0.0
    %845 = vmatprep.subr.mxu0 0.0
    %846 = vmatpush2.msra.mxu0 0.0
    %847 = vmatprep.subr.mxu0 0.0
    %848 = vmatpush2.msra.mxu0 0.0
    %849 = vmatprep.subr.mxu0 0.0
    %850 = vmatpush2.msra.mxu0 0.0
    %851 = vmatprep.subr.mxu0 0.0
    %852 = vmatpush2.msra.mxu0 0.0
    %853 = vmatprep.subr.mxu0 0.0
    %854 = vmatpush2.msra.mxu0 0.0
    %855 = vmatprep.subr.mxu0 0.0
    %856 = vmatpush2.msra.mxu0 0.0
    %857 = vmatprep.subr.mxu0 0.0
    %858 = vmatpush2.msra.mxu0 0.0
    %859 = vmatprep.subr.mxu0 0.0
    %860 = vmatpush2.msra.mxu0 0.0
    %861 = vmatprep.subr.mxu0 0.0
    %862 = vmatpush2.msra.mxu0 0.0
    %863 = vmatprep.mubr.f32.mxu0 0.0
    %864 = vmatmul.mubr.f32.gmra.mxu0 %v797
    %v865 = vpop.f32.mrf.mxu0
    %v866 = vadd.f32 0.0, %v865
    %v867 = vpop.f32.mrf.mxu0
    %868 = vdwg.mxu0
    %v870 = vrot.slane %v866, 6
    %v872 = vadd.f32 %v785, %v870
    %v873 = vtanh.pop %v872
    %v874 = vtanh.pop %v873
    %v877 = vunpack.c.l.s4 1983009808
    %v878 = vunpack.c.0.s8 %v877
    %v879 = vlaneseq
    %v880 = vshrl.u32 %v879, 7
    %v881 = vsub.s32 %v878, %v880
    %v882 = vrot.slane %v874, %v881
    %v883 = vcombine.high %v882, %v882
    %884 = vrot.lane.b32.xlu0 %v883, 32
    %v885 = vpop.permute.xlu0 %884
    %vm887 = vcmask 517376
    %888 = vst.msk [vmem:[#allocation3] sm:$0x3] %vm887, %v885
    %v890 = vrot.slane %v873, 2
    %v891 = vsel %vm136, %v890, 0
    %893 = vmatprep.subr.mxu0 0.0
    %894 = vmatpush1.msra.mxu0 0.0
    %895 = vmatprep.subr.mxu0 0.0
    %896 = vmatpush1.msra.mxu0 0.0
    %897 = vmatprep.subr.mxu0 0.0
    %898 = vmatpush1.msra.mxu0 0.0
    %899 = vmatprep.subr.mxu0 0.0
    %900 = vmatpush1.msra.mxu0 0.0
    %901 = vmatprep.subr.mxu0 0.0
    %902 = vmatpush1.msra.mxu0 0.0
    %903 = vmatprep.subr.mxu0 0.0
    %904 = vmatpush1.msra.mxu0 0.0
    %905 = vmatprep.subr.mxu0 0.0
    %906 = vmatpush1.msra.mxu0 0.0
    %907 = vmatprep.subr.mxu0 0.0
    %908 = vmatpush1.msra.mxu0 0.0
    %909 = vmatprep.subr.mxu0 0.0
    %910 = vmatpush1.msra.mxu0 0.0
    %911 = vmatprep.subr.mxu0 0.0
    %912 = vmatpush1.msra.mxu0 0.0
    %913 = vmatprep.subr.mxu0 0.0
    %914 = vmatpush1.msra.mxu0 0.0
    %915 = vmatprep.subr.mxu0 0.0
    %916 = vmatpush1.msra.mxu0 0.0
    %917 = vmatprep.subr.mxu0 0.0
    %918 = vmatpush1.msra.mxu0 %v704
    %919 = vmatprep.subr.mxu0 0.0
    %920 = vmatpush1.msra.mxu0 %v703
    %921 = vmatprep.subr.mxu0 0.0
    %922 = vmatpush1.msra.mxu0 %v702
    %923 = vmatprep.subr.mxu0 0.0
    %924 = vmatpush1.msra.mxu0 %v701
    %925 = vmatprep.subr.mxu0 0.0
    %926 = vmatpush2.msra.mxu0 0.0
    %927 = vmatprep.subr.mxu0 0.0
    %928 = vmatpush2.msra.mxu0 0.0
    %929 = vmatprep.subr.mxu0 0.0
    %930 = vmatpush2.msra.mxu0 0.0
    %931 = vmatprep.subr.mxu0 0.0
    %932 = vmatpush2.msra.mxu0 0.0
    %933 = vmatprep.subr.mxu0 0.0
    %934 = vmatpush2.msra.mxu0 0.0
    %935 = vmatprep.subr.mxu0 0.0
    %936 = vmatpush2.msra.mxu0 0.0
    %937 = vmatprep.subr.mxu0 0.0
    %938 = vmatpush2.msra.mxu0 0.0
    %939 = vmatprep.subr.mxu0 0.0
    %940 = vmatpush2.msra.mxu0 0.0
    %941 = vmatprep.subr.mxu0 0.0
    %942 = vmatpush2.msra.mxu0 0.0
    %943 = vmatprep.subr.mxu0 0.0
    %944 = vmatpush2.msra.mxu0 0.0
    %945 = vmatprep.subr.mxu0 0.0
    %946 = vmatpush2.msra.mxu0 0.0
    %947 = vmatprep.subr.mxu0 0.0
    %948 = vmatpush2.msra.mxu0 0.0
    %949 = vmatprep.subr.mxu0 0.0
    %950 = vmatpush2.msra.mxu0 0.0
    %951 = vmatprep.subr.mxu0 0.0
    %952 = vmatpush2.msra.mxu0 0.0
    %953 = vmatprep.subr.mxu0 0.0
    %954 = vmatpush2.msra.mxu0 0.0
    %955 = vmatprep.subr.mxu0 0.0
    %956 = vmatpush2.msra.mxu0 0.0
    %957 = vmatprep.mubr.f32.mxu0 0.0
    %958 = vmatmul.mubr.f32.gmra.mxu0 %v891
    %v959 = vpop.f32.mrf.mxu0
    %v960 = vadd.f32 0.0, %v959
    %v961 = vpop.f32.mrf.mxu0
    %962 = vdwg.mxu0
    %v964 = vrot.slane %v960, 4
    %v966 = vadd.f32 %v785, %v964
    %v967 = vtanh.pop %v966
    %v968 = vtanh.pop %v967
    %v970 = vcombine.high %v968, %v968
    %v972 = vunpack.c.l.s4 1983009808
    %v973 = vunpack.c.0.s8 %v972
    %v974 = vlaneseq
    %v975 = vshrl.u32 %v974, 7
    %v976 = vsub.s32 %v973, %v975
    %v977 = vrot.slane %v970, %v976
    %978 = vrot.lane.b32.xlu0 %v977, 64
    %v979 = vpop.permute.xlu0 %978
    %vm981 = vcmask 779776
    %982 = vst.msk [vmem:[#allocation3] sm:$0x3] %vm981, %v979
    %v984 = vrot.slane %v967, 4
    %v985 = vsel %vm136, %v984, 0
    %987 = vmatprep.subr.mxu0 0.0
    %988 = vmatpush1.msra.mxu0 0.0
    %989 = vmatprep.subr.mxu0 0.0
    %990 = vmatpush1.msra.mxu0 0.0
    %991 = vmatprep.subr.mxu0 0.0
    %992 = vmatpush1.msra.mxu0 0.0
    %993 = vmatprep.subr.mxu0 0.0
    %994 = vmatpush1.msra.mxu0 0.0
    %995 = vmatprep.subr.mxu0 0.0
    %996 = vmatpush1.msra.mxu0 0.0
    %997 = vmatprep.subr.mxu0 0.0
    %998 = vmatpush1.msra.mxu0 0.0
    %999 = vmatprep.subr.mxu0 0.0
    %1000 = vmatpush1.msra.mxu0 0.0
    %1001 = vmatprep.subr.mxu0 0.0
    %1002 = vmatpush1.msra.mxu0 0.0
    %1003 = vmatprep.subr.mxu0 0.0
    %1004 = vmatpush1.msra.mxu0 0.0
    %1005 = vmatprep.subr.mxu0 0.0
    %1006 = vmatpush1.msra.mxu0 0.0
    %1007 = vmatprep.subr.mxu0 0.0
    %1008 = vmatpush1.msra.mxu0 0.0
    %1009 = vmatprep.subr.mxu0 0.0
    %1010 = vmatpush1.msra.mxu0 0.0
    %1011 = vmatprep.subr.mxu0 0.0
    %1012 = vmatpush1.msra.mxu0 %v704
    %1013 = vmatprep.subr.mxu0 0.0
    %1014 = vmatpush1.msra.mxu0 %v703
    %1015 = vmatprep.subr.mxu0 0.0
    %1016 = vmatpush1.msra.mxu0 %v702
    %1017 = vmatprep.subr.mxu0 0.0
    %1018 = vmatpush1.msra.mxu0 %v701
    %1019 = vmatprep.subr.mxu0 0.0
    %1020 = vmatpush2.msra.mxu0 0.0
    %1021 = vmatprep.subr.mxu0 0.0
    %1022 = vmatpush2.msra.mxu0 0.0
    %1023 = vmatprep.subr.mxu0 0.0
    %1024 = vmatpush2.msra.mxu0 0.0
    %1025 = vmatprep.subr.mxu0 0.0
    %1026 = vmatpush2.msra.mxu0 0.0
    %1027 = vmatprep.subr.mxu0 0.0
    %1028 = vmatpush2.msra.mxu0 0.0
    %1029 = vmatprep.subr.mxu0 0.0
    %1030 = vmatpush2.msra.mxu0 0.0
    %1031 = vmatprep.subr.mxu0 0.0
    %1032 = vmatpush2.msra.mxu0 0.0
    %1033 = vmatprep.subr.mxu0 0.0
    %1034 = vmatpush2.msra.mxu0 0.0
    %1035 = vmatprep.subr.mxu0 0.0
    %1036 = vmatpush2.msra.mxu0 0.0
    %1037 = vmatprep.subr.mxu0 0.0
    %1038 = vmatpush2.msra.mxu0 0.0
    %1039 = vmatprep.subr.mxu0 0.0
    %1040 = vmatpush2.msra.mxu0 0.0
    %1041 = vmatprep.subr.mxu0 0.0
    %1042 = vmatpush2.msra.mxu0 0.0
    %1043 = vmatprep.subr.mxu0 0.0
    %1044 = vmatpush2.msra.mxu0 0.0
    %1045 = vmatprep.subr.mxu0 0.0
    %1046 = vmatpush2.msra.mxu0 0.0
    %1047 = vmatprep.subr.mxu0 0.0
    %1048 = vmatpush2.msra.mxu0 0.0
    %1049 = vmatprep.subr.mxu0 0.0
    %1050 = vmatpush2.msra.mxu0 0.0
    %1051 = vmatprep.mubr.f32.mxu0 0.0
    %1052 = vmatmul.mubr.f32.gmra.mxu0 %v985
    %v1053 = vpop.f32.mrf.mxu0
    %v1054 = vadd.f32 0.0, %v1053
    %v1055 = vpop.f32.mrf.mxu0
    %1056 = vdwg.mxu0
    %v1058 = vrot.slane %v1054, 2
    %v1060 = vadd.f32 %v785, %v1058
    %v1061 = vtanh.pop %v1060
    %v1062 = vtanh.pop %v1061
    %v1064 = vcombine.high %v1062, %v1062
    %v1066 = vunpack.c.l.s4 1983009808
    %v1067 = vunpack.c.0.s8 %v1066
    %v1068 = vlaneseq
    %v1069 = vshrl.u32 %v1068, 7
    %v1070 = vsub.s32 %v1067, %v1069
    %v1071 = vrot.slane %v1064, %v1070
    %v1072 = vcombine.high %v1071, %v1071
    %1073 = vrot.lane.b32.xlu0 %v1072, 96
    %v1074 = vpop.permute.xlu0 %1073
    %vm1076 = vcmask 1042176
    %1077 = vst.msk [vmem:[#allocation3] sm:$0x3] %vm1076, %v1074
    %v1079 = vrot.slane %v1061, 6
    %v1080 = vsel %vm136, %v1079, 0
    %1082 = vmatprep.subr.mxu0 0.0
    %1083 = vmatpush1.msra.mxu0 0.0
    %1084 = vmatprep.subr.mxu0 0.0
    %1085 = vmatpush1.msra.mxu0 0.0
    %1086 = vmatprep.subr.mxu0 0.0
    %1087 = vmatpush1.msra.mxu0 0.0
    %1088 = vmatprep.subr.mxu0 0.0
    %1089 = vmatpush1.msra.mxu0 0.0
    %1090 = vmatprep.subr.mxu0 0.0
    %1091 = vmatpush1.msra.mxu0 0.0
    %1092 = vmatprep.subr.mxu0 0.0
    %1093 = vmatpush1.msra.mxu0 0.0
    %1094 = vmatprep.subr.mxu0 0.0
    %1095 = vmatpush1.msra.mxu0 0.0
    %1096 = vmatprep.subr.mxu0 0.0
    %1097 = vmatpush1.msra.mxu0 0.0
    %1098 = vmatprep.subr.mxu0 0.0
    %1099 = vmatpush1.msra.mxu0 0.0
    %1100 = vmatprep.subr.mxu0 0.0
    %1101 = vmatpush1.msra.mxu0 0.0
    %1102 = vmatprep.subr.mxu0 0.0
    %1103 = vmatpush1.msra.mxu0 0.0
    %1104 = vmatprep.subr.mxu0 0.0
    %1105 = vmatpush1.msra.mxu0 0.0
    %1106 = vmatprep.subr.mxu0 0.0
    %1107 = vmatpush1.msra.mxu0 %v704
    %1108 = vmatprep.subr.mxu0 0.0
    %1109 = vmatpush1.msra.mxu0 %v703
    %1110 = vmatprep.subr.mxu0 0.0
    %1111 = vmatpush1.msra.mxu0 %v702
    %1112 = vmatprep.subr.mxu0 0.0
    %1113 = vmatpush1.msra.mxu0 %v701
    %1114 = vmatprep.subr.mxu0 0.0
    %1115 = vmatpush2.msra.mxu0 0.0
    %1116 = vmatprep.subr.mxu0 0.0
    %1117 = vmatpush2.msra.mxu0 0.0
    %1118 = vmatprep.subr.mxu0 0.0
    %1119 = vmatpush2.msra.mxu0 0.0
    %1120 = vmatprep.subr.mxu0 0.0
    %1121 = vmatpush2.msra.mxu0 0.0
    %1122 = vmatprep.subr.mxu0 0.0
    %1123 = vmatpush2.msra.mxu0 0.0
    %1124 = vmatprep.subr.mxu0 0.0
    %1125 = vmatpush2.msra.mxu0 0.0
    %1126 = vmatprep.subr.mxu0 0.0
    %1127 = vmatpush2.msra.mxu0 0.0
    %1128 = vmatprep.subr.mxu0 0.0
    %1129 = vmatpush2.msra.mxu0 0.0
    %1130 = vmatprep.subr.mxu0 0.0
    %1131 = vmatpush2.msra.mxu0 0.0
    %1132 = vmatprep.subr.mxu0 0.0
    %1133 = vmatpush2.msra.mxu0 0.0
    %1134 = vmatprep.subr.mxu0 0.0
    %1135 = vmatpush2.msra.mxu0 0.0
    %1136 = vmatprep.subr.mxu0 0.0
    %1137 = vmatpush2.msra.mxu0 0.0
    %1138 = vmatprep.subr.mxu0 0.0
    %1139 = vmatpush2.msra.mxu0 0.0
    %1140 = vmatprep.subr.mxu0 0.0
    %1141 = vmatpush2.msra.mxu0 0.0
    %1142 = vmatprep.subr.mxu0 0.0
    %1143 = vmatpush2.msra.mxu0 0.0
    %1144 = vmatprep.subr.mxu0 0.0
    %1145 = vmatpush2.msra.mxu0 0.0
    %1146 = vmatprep.mubr.f32.mxu0 0.0
    %1147 = vmatmul.mubr.f32.gmra.mxu0 %v1080
    %v1148 = vpop.f32.mrf.mxu0
    %v1149 = vadd.f32 0.0, %v1148
    %v1150 = vpop.f32.mrf.mxu0
    %1151 = vdwg.mxu0
    %v1152 = vadd.f32 %v790, %v1149
    %v1153 = vtanh.pop %v1152
    %v1154 = vtanh.pop %v1153
    %1155 = vst.msk [vmem:[#allocation3 + $0x2] sm:$0x3] %vm134, %v1154
    %v1157 = vsel %vm136, %v1153, 0
    %1159 = vmatprep.subr.mxu0 0.0
    %1160 = vmatpush1.msra.mxu0 0.0
    %1161 = vmatprep.subr.mxu0 0.0
    %1162 = vmatpush1.msra.mxu0 0.0
    %1163 = vmatprep.subr.mxu0 0.0
    %1164 = vmatpush1.msra.mxu0 0.0
    %1165 = vmatprep.subr.mxu0 0.0
    %1166 = vmatpush1.msra.mxu0 0.0
    %1167 = vmatprep.subr.mxu0 0.0
    %1168 = vmatpush1.msra.mxu0 0.0
    %1169 = vmatprep.subr.mxu0 0.0
    %1170 = vmatpush1.msra.mxu0 0.0
    %1171 = vmatprep.subr.mxu0 0.0
    %1172 = vmatpush1.msra.mxu0 0.0
    %1173 = vmatprep.subr.mxu0 0.0
    %1174 = vmatpush1.msra.mxu0 0.0
    %1175 = vmatprep.subr.mxu0 0.0
    %1176 = vmatpush1.msra.mxu0 0.0
    %1177 = vmatprep.subr.mxu0 0.0
    %1178 = vmatpush1.msra.mxu0 0.0
    %1179 = vmatprep.subr.mxu0 0.0
    %1180 = vmatpush1.msra.mxu0 0.0
    %1181 = vmatprep.subr.mxu0 0.0
    %1182 = vmatpush1.msra.mxu0 0.0
    %1183 = vmatprep.subr.mxu0 0.0
    %1184 = vmatpush1.msra.mxu0 %v704
    %1185 = vmatprep.subr.mxu0 0.0
    %1186 = vmatpush1.msra.mxu0 %v703
    %1187 = vmatprep.subr.mxu0 0.0
    %1188 = vmatpush1.msra.mxu0 %v702
    %1189 = vmatprep.subr.mxu0 0.0
    %1190 = vmatpush1.msra.mxu0 %v701
    %1191 = vmatprep.subr.mxu0 0.0
    %1192 = vmatpush2.msra.mxu0 0.0
    %1193 = vmatprep.subr.mxu0 0.0
    %1194 = vmatpush2.msra.mxu0 0.0
    %1195 = vmatprep.subr.mxu0 0.0
    %1196 = vmatpush2.msra.mxu0 0.0
    %1197 = vmatprep.subr.mxu0 0.0
    %1198 = vmatpush2.msra.mxu0 0.0
    %1199 = vmatprep.subr.mxu0 0.0
    %1200 = vmatpush2.msra.mxu0 0.0
    %1201 = vmatprep.subr.mxu0 0.0
    %1202 = vmatpush2.msra.mxu0 0.0
    %1203 = vmatprep.subr.mxu0 0.0
    %1204 = vmatpush2.msra.mxu0 0.0
    %1205 = vmatprep.subr.mxu0 0.0
    %1206 = vmatpush2.msra.mxu0 0.0
    %1207 = vmatprep.subr.mxu0 0.0
    %1208 = vmatpush2.msra.mxu0 0.0
    %1209 = vmatprep.subr.mxu0 0.0
    %1210 = vmatpush2.msra.mxu0 0.0
    %1211 = vmatprep.subr.mxu0 0.0
    %1212 = vmatpush2.msra.mxu0 0.0
    %1213 = vmatprep.subr.mxu0 0.0
    %1214 = vmatpush2.msra.mxu0 0.0
    %1215 = vmatprep.subr.mxu0 0.0
    %1216 = vmatpush2.msra.mxu0 0.0
    %1217 = vmatprep.subr.mxu0 0.0
    %1218 = vmatpush2.msra.mxu0 0.0
    %1219 = vmatprep.subr.mxu0 0.0
    %1220 = vmatpush2.msra.mxu0 0.0
    %1221 = vmatprep.subr.mxu0 0.0
    %1222 = vmatpush2.msra.mxu0 0.0
    %1223 = vmatprep.mubr.f32.mxu0 0.0
    %1224 = vmatmul.mubr.f32.gmra.mxu0 %v1157
    %v1225 = vpop.f32.mrf.mxu0
    %v1226 = vadd.f32 0.0, %v1225
    %v1227 = vpop.f32.mrf.mxu0
    %1228 = vdwg.mxu0
    %v1230 = vrot.slane %v1226, 6
    %v1232 = vadd.f32 %v790, %v1230
    %v1233 = vtanh.pop %v1232
    %v1234 = vtanh.pop %v1233
    %v1237 = vunpack.c.l.s4 1983009808
    %v1238 = vunpack.c.0.s8 %v1237
    %v1239 = vlaneseq
    %v1240 = vshrl.u32 %v1239, 7
    %v1241 = vsub.s32 %v1238, %v1240
    %v1242 = vrot.slane %v1234, %v1241
    %v1243 = vcombine.high %v1242, %v1242
    %1244 = vrot.lane.b32.xlu0 %v1243, 32
    %v1245 = vpop.permute.xlu0 %1244
    %1247 = vst.msk [vmem:[#allocation3 + $0x2] sm:$0x3] %vm887, %v1245
    %v1249 = vrot.slane %v1233, 2
    %v1250 = vsel %vm136, %v1249, 0
    %1252 = vmatprep.subr.mxu0 0.0
    %1253 = vmatpush1.msra.mxu0 0.0
    %1254 = vmatprep.subr.mxu0 0.0
    %1255 = vmatpush1.msra.mxu0 0.0
    %1256 = vmatprep.subr.mxu0 0.0
    %1257 = vmatpush1.msra.mxu0 0.0
    %1258 = vmatprep.subr.mxu0 0.0
    %1259 = vmatpush1.msra.mxu0 0.0
    %1260 = vmatprep.subr.mxu0 0.0
    %1261 = vmatpush1.msra.mxu0 0.0
    %1262 = vmatprep.subr.mxu0 0.0
    %1263 = vmatpush1.msra.mxu0 0.0
    %1264 = vmatprep.subr.mxu0 0.0
    %1265 = vmatpush1.msra.mxu0 0.0
    %1266 = vmatprep.subr.mxu0 0.0
    %1267 = vmatpush1.msra.mxu0 0.0
    %1268 = vmatprep.subr.mxu0 0.0
    %1269 = vmatpush1.msra.mxu0 0.0
    %1270 = vmatprep.subr.mxu0 0.0
    %1271 = vmatpush1.msra.mxu0 0.0
    %1272 = vmatprep.subr.mxu0 0.0
    %1273 = vmatpush1.msra.mxu0 0.0
    %1274 = vmatprep.subr.mxu0 0.0
    %1275 = vmatpush1.msra.mxu0 0.0
    %1276 = vmatprep.subr.mxu0 0.0
    %1277 = vmatpush1.msra.mxu0 %v704
    %1278 = vmatprep.subr.mxu0 0.0
    %1279 = vmatpush1.msra.mxu0 %v703
    %1280 = vmatprep.subr.mxu0 0.0
    %1281 = vmatpush1.msra.mxu0 %v702
    %1282 = vmatprep.subr.mxu0 0.0
    %1283 = vmatpush1.msra.mxu0 %v701
    %1284 = vmatprep.subr.mxu0 0.0
    %1285 = vmatpush2.msra.mxu0 0.0
    %1286 = vmatprep.subr.mxu0 0.0
    %1287 = vmatpush2.msra.mxu0 0.0
    %1288 = vmatprep.subr.mxu0 0.0
    %1289 = vmatpush2.msra.mxu0 0.0
    %1290 = vmatprep.subr.mxu0 0.0
    %1291 = vmatpush2.msra.mxu0 0.0
    %1292 = vmatprep.subr.mxu0 0.0
    %1293 = vmatpush2.msra.mxu0 0.0
    %1294 = vmatprep.subr.mxu0 0.0
    %1295 = vmatpush2.msra.mxu0 0.0
    %1296 = vmatprep.subr.mxu0 0.0
    %1297 = vmatpush2.msra.mxu0 0.0
    %1298 = vmatprep.subr.mxu0 0.0
    %1299 = vmatpush2.msra.mxu0 0.0
    %1300 = vmatprep.subr.mxu0 0.0
    %1301 = vmatpush2.msra.mxu0 0.0
    %1302 = vmatprep.subr.mxu0 0.0
    %1303 = vmatpush2.msra.mxu0 0.0
    %1304 = vmatprep.subr.mxu0 0.0
    %1305 = vmatpush2.msra.mxu0 0.0
    %1306 = vmatprep.subr.mxu0 0.0
    %1307 = vmatpush2.msra.mxu0 0.0
    %1308 = vmatprep.subr.mxu0 0.0
    %1309 = vmatpush2.msra.mxu0 0.0
    %1310 = vmatprep.subr.mxu0 0.0
    %1311 = vmatpush2.msra.mxu0 0.0
    %1312 = vmatprep.subr.mxu0 0.0
    %1313 = vmatpush2.msra.mxu0 0.0
    %1314 = vmatprep.subr.mxu0 0.0
    %1315 = vmatpush2.msra.mxu0 0.0
    %1316 = vmatprep.mubr.f32.mxu0 0.0
    %1317 = vmatmul.mubr.f32.gmra.mxu0 %v1250
    %v1318 = vpop.f32.mrf.mxu0
    %v1319 = vadd.f32 0.0, %v1318
    %v1320 = vpop.f32.mrf.mxu0
    %1321 = vdwg.mxu0
    %v1323 = vrot.slane %v1319, 4
    %v1325 = vadd.f32 %v790, %v1323
    %v1326 = vtanh.pop %v1325
    %v1327 = vtanh.pop %v1326
    %v1329 = vcombine.high %v1327, %v1327
    %v1331 = vunpack.c.l.s4 1983009808
    %v1332 = vunpack.c.0.s8 %v1331
    %v1333 = vlaneseq
    %v1334 = vshrl.u32 %v1333, 7
    %v1335 = vsub.s32 %v1332, %v1334
    %v1336 = vrot.slane %v1329, %v1335
    %1337 = vrot.lane.b32.xlu0 %v1336, 64
    %v1338 = vpop.permute.xlu0 %1337
    %1340 = vst.msk [vmem:[#allocation3 + $0x2] sm:$0x3] %vm981, %v1338
    %v1342 = vrot.slane %v1326, 4
    %v1343 = vsel %vm136, %v1342, 0
    %1345 = vmatprep.subr.mxu0 0.0
    %1346 = vmatpush1.msra.mxu0 0.0
    %1347 = vmatprep.subr.mxu0 0.0
    %1348 = vmatpush1.msra.mxu0 0.0
    %1349 = vmatprep.subr.mxu0 0.0
    %1350 = vmatpush1.msra.mxu0 0.0
    %1351 = vmatprep.subr.mxu0 0.0
    %1352 = vmatpush1.msra.mxu0 0.0
    %1353 = vmatprep.subr.mxu0 0.0
    %1354 = vmatpush1.msra.mxu0 0.0
    %1355 = vmatprep.subr.mxu0 0.0
    %1356 = vmatpush1.msra.mxu0 0.0
    %1357 = vmatprep.subr.mxu0 0.0
    %1358 = vmatpush1.msra.mxu0 0.0
    %1359 = vmatprep.subr.mxu0 0.0
    %1360 = vmatpush1.msra.mxu0 0.0
    %1361 = vmatprep.subr.mxu0 0.0
    %1362 = vmatpush1.msra.mxu0 0.0
    %1363 = vmatprep.subr.mxu0 0.0
    %1364 = vmatpush1.msra.mxu0 0.0
    %1365 = vmatprep.subr.mxu0 0.0
    %1366 = vmatpush1.msra.mxu0 0.0
    %1367 = vmatprep.subr.mxu0 0.0
    %1368 = vmatpush1.msra.mxu0 0.0
    %1369 = vmatprep.subr.mxu0 0.0
    %1370 = vmatpush1.msra.mxu0 %v704
    %1371 = vmatprep.subr.mxu0 0.0
    %1372 = vmatpush1.msra.mxu0 %v703
    %1373 = vmatprep.subr.mxu0 0.0
    %1374 = vmatpush1.msra.mxu0 %v702
    %1375 = vmatprep.subr.mxu0 0.0
    %1376 = vmatpush1.msra.mxu0 %v701
    %1377 = vmatprep.subr.mxu0 0.0
    %1378 = vmatpush2.msra.mxu0 0.0
    %1379 = vmatprep.subr.mxu0 0.0
    %1380 = vmatpush2.msra.mxu0 0.0
    %1381 = vmatprep.subr.mxu0 0.0
    %1382 = vmatpush2.msra.mxu0 0.0
    %1383 = vmatprep.subr.mxu0 0.0
    %1384 = vmatpush2.msra.mxu0 0.0
    %1385 = vmatprep.subr.mxu0 0.0
    %1386 = vmatpush2.msra.mxu0 0.0
    %1387 = vmatprep.subr.mxu0 0.0
    %1388 = vmatpush2.msra.mxu0 0.0
    %1389 = vmatprep.subr.mxu0 0.0
    %1390 = vmatpush2.msra.mxu0 0.0
    %1391 = vmatprep.subr.mxu0 0.0
    %1392 = vmatpush2.msra.mxu0 0.0
    %1393 = vmatprep.subr.mxu0 0.0
    %1394 = vmatpush2.msra.mxu0 0.0
    %1395 = vmatprep.subr.mxu0 0.0
    %1396 = vmatpush2.msra.mxu0 0.0
    %1397 = vmatprep.subr.mxu0 0.0
    %1398 = vmatpush2.msra.mxu0 0.0
    %1399 = vmatprep.subr.mxu0 0.0
    %1400 = vmatpush2.msra.mxu0 0.0
    %1401 = vmatprep.subr.mxu0 0.0
    %1402 = vmatpush2.msra.mxu0 0.0
    %1403 = vmatprep.subr.mxu0 0.0
    %1404 = vmatpush2.msra.mxu0 0.0
    %1405 = vmatprep.subr.mxu0 0.0
    %1406 = vmatpush2.msra.mxu0 0.0
    %1407 = vmatprep.subr.mxu0 0.0
    %1408 = vmatpush2.msra.mxu0 0.0
    %1409 = vmatprep.mubr.f32.mxu0 0.0
    %1410 = vmatmul.mubr.f32.gmra.mxu0 %v1343
    %v1411 = vpop.f32.mrf.mxu0
    %v1412 = vadd.f32 0.0, %v1411
    %v1413 = vpop.f32.mrf.mxu0
    %1414 = vdwg.mxu0
    %v1416 = vrot.slane %v1412, 2
    %v1418 = vadd.f32 %v790, %v1416
    %v1419 = vtanh.pop %v1418
    %v1420 = vtanh.pop %v1419
    %v1422 = vcombine.high %v1420, %v1420
    %v1424 = vunpack.c.l.s4 1983009808
    %v1425 = vunpack.c.0.s8 %v1424
    %v1426 = vlaneseq
    %v1427 = vshrl.u32 %v1426, 7
    %v1428 = vsub.s32 %v1425, %v1427
    %v1429 = vrot.slane %v1422, %v1428
    %v1430 = vcombine.high %v1429, %v1429
    %1431 = vrot.lane.b32.xlu0 %v1430, 96
    %v1432 = vpop.permute.xlu0 %1431
    %1434 = vst.msk [vmem:[#allocation3 + $0x2] sm:$0x3] %vm1076, %v1432
    %v1435 = vld [vmem:[#allocation3] sm:$0xf]
    %v1436 = vld [vmem:[%s7] sm:$0xff]
    %v1437 = vld [vmem:[%s7 + $0x8] sm:$0xff]
    %v1438 = vld [vmem:[%s7 + $0x10] sm:$0xff]
    %v1439 = vld [vmem:[%s7 + $0x18] sm:$0xff]
    %v1440 = vld [vmem:[%s7 + $0x20] sm:$0xff]
    %v1441 = vld [vmem:[%s7 + $0x28] sm:$0xff]
    %v1442 = vld [vmem:[%s7 + $0x30] sm:$0xff]
    %v1443 = vld [vmem:[%s7 + $0x38] sm:$0xff]
    %v1444 = vld [vmem:[%s7 + $0x40] sm:$0xff]
    %v1445 = vld [vmem:[%s7 + $0x48] sm:$0xff]
    %v1446 = vld [vmem:[%s7 + $0x50] sm:$0xff]
    %v1447 = vld [vmem:[%s7 + $0x58] sm:$0xff]
    %v1448 = vld [vmem:[%s7 + $0x60] sm:$0xff]
    %v1449 = vld [vmem:[%s7 + $0x68] sm:$0xff]
    %v1450 = vld [vmem:[%s7 + $0x70] sm:$0xff]
    %v1451 = vld [vmem:[%s7 + $0x78] sm:$0xff]
    %v1452 = vld [vmem:[%s7 + $0x80] sm:$0xff]
    %v1453 = vld [vmem:[%s7 + $0x88] sm:$0xff]
    %v1454 = vld [vmem:[%s7 + $0x90] sm:$0xff]
    %v1455 = vld [vmem:[%s7 + $0x98] sm:$0xff]
    %v1456 = vld [vmem:[%s7 + $0xa0] sm:$0xff]
    %v1457 = vld [vmem:[%s7 + $0xa8] sm:$0xff]
    %v1458 = vld [vmem:[%s7 + $0xb0] sm:$0xff]
    %v1459 = vld [vmem:[%s7 + $0xb8] sm:$0xff]
    %v1460 = vld [vmem:[%s7 + $0xc0] sm:$0xff]
    %v1461 = vld [vmem:[%s7 + $0xc8] sm:$0xff]
    %v1462 = vld [vmem:[%s7 + $0xd0] sm:$0xff]
    %v1463 = vld [vmem:[%s7 + $0xd8] sm:$0xff]
    %v1464 = vld [vmem:[%s7 + $0xe0] sm:$0xff]
    %v1465 = vld [vmem:[%s7 + $0xe8] sm:$0xff]
    %v1466 = vld [vmem:[%s7 + $0xf0] sm:$0xff]
    %v1467 = vld [vmem:[%s7 + $0xf8] sm:$0xff]
    %v1468 = vld [vmem:[%s8] sm:$0x1]
    %v1470 = vlaneseq
    %v1471 = vshrl.u32 %v1470, 7
    %v1472 = vsub.s32 0, %v1471
    %v1473 = vrot.slane %v1468, %v1472
    %v1477 = vunpack.c.l.s4 1983009808
    %v1478 = vunpack.c.0.s8 %v1477
    %v1479 = vlaneseq
    %v1480 = vshrl.u32 %v1479, 7
    %v1481 = vsub.s32 %v1478, %v1480
    %v1482 = vrot.slane %v1435, %v1481
    %v1483 = vcombine.high %v1482, %v1482
    %1486 = vmatprep.subr.mxu0 0.0
    %1487 = vmatpush1.msra.mxu0 %v1451
    %1488 = vmatprep.subr.mxu0 0.0
    %1489 = vmatpush1.msra.mxu0 %v1450
    %1490 = vmatprep.subr.mxu0 0.0
    %1491 = vmatpush1.msra.mxu0 %v1449
    %1492 = vmatprep.subr.mxu0 0.0
    %1493 = vmatpush1.msra.mxu0 %v1448
    %1494 = vmatprep.subr.mxu0 0.0
    %1495 = vmatpush1.msra.mxu0 %v1447
    %1496 = vmatprep.subr.mxu0 0.0
    %1497 = vmatpush1.msra.mxu0 %v1446
    %1498 = vmatprep.subr.mxu0 0.0
    %1499 = vmatpush1.msra.mxu0 %v1445
    %1500 = vmatprep.subr.mxu0 0.0
    %1501 = vmatpush1.msra.mxu0 %v1444
    %1502 = vmatprep.subr.mxu0 0.0
    %1503 = vmatpush1.msra.mxu0 %v1443
    %1504 = vmatprep.subr.mxu0 0.0
    %1505 = vmatpush1.msra.mxu0 %v1442
    %1506 = vmatprep.subr.mxu0 0.0
    %1507 = vmatpush1.msra.mxu0 %v1441
    %1508 = vmatprep.subr.mxu0 0.0
    %1509 = vmatpush1.msra.mxu0 %v1440
    %1510 = vmatprep.subr.mxu0 0.0
    %1511 = vmatpush1.msra.mxu0 %v1439
    %1512 = vmatprep.subr.mxu0 0.0
    %1513 = vmatpush1.msra.mxu0 %v1438
    %1514 = vmatprep.subr.mxu0 0.0
    %1515 = vmatpush1.msra.mxu0 %v1437
    %1516 = vmatprep.subr.mxu0 0.0
    %1517 = vmatpush1.msra.mxu0 %v1436
    %1518 = vmatprep.subr.mxu0 0.0
    %1519 = vmatpush2.msra.mxu0 %v1467
    %1520 = vmatprep.subr.mxu0 0.0
    %1521 = vmatpush2.msra.mxu0 %v1466
    %1522 = vmatprep.subr.mxu0 0.0
    %1523 = vmatpush2.msra.mxu0 %v1465
    %1524 = vmatprep.subr.mxu0 0.0
    %1525 = vmatpush2.msra.mxu0 %v1464
    %1526 = vmatprep.subr.mxu0 0.0
    %1527 = vmatpush2.msra.mxu0 %v1463
    %1528 = vmatprep.subr.mxu0 0.0
    %1529 = vmatpush2.msra.mxu0 %v1462
    %1530 = vmatprep.subr.mxu0 0.0
    %1531 = vmatpush2.msra.mxu0 %v1461
    %1532 = vmatprep.subr.mxu0 0.0
    %1533 = vmatpush2.msra.mxu0 %v1460
    %1534 = vmatprep.subr.mxu0 0.0
    %1535 = vmatpush2.msra.mxu0 %v1459
    %1536 = vmatprep.subr.mxu0 0.0
    %1537 = vmatpush2.msra.mxu0 %v1458
    %1538 = vmatprep.subr.mxu0 0.0
    %1539 = vmatpush2.msra.mxu0 %v1457
    %1540 = vmatprep.subr.mxu0 0.0
    %1541 = vmatpush2.msra.mxu0 %v1456
    %1542 = vmatprep.subr.mxu0 0.0
    %1543 = vmatpush2.msra.mxu0 %v1455
    %1544 = vmatprep.subr.mxu0 0.0
    %1545 = vmatpush2.msra.mxu0 %v1454
    %1546 = vmatprep.subr.mxu0 0.0
    %1547 = vmatpush2.msra.mxu0 %v1453
    %1548 = vmatprep.subr.mxu0 0.0
    %1549 = vmatpush2.msra.mxu0 %v1452
    %1550 = vmatprep.mubr.f32.mxu0 %v1483
    %1551 = vmatmul.mubr.f32.gmra.mxu0 %v1482
    %v1552 = vpop.f32.mrf.mxu0
    %v1553 = vadd.f32 %v1473, %v1552
    %v1554 = vpop.f32.mrf.mxu0
    %1555 = vdwg.mxu0
    %vm1556 = vcmask 25600
    %1557 = vst.msk [vmem:[#allocation4] sm:$0x3] %vm1556, %v1553
    // Predicated region
    $region38: #{tpu_custom_call.1} parent=1 // pred_check
      _
    $region39: #{tpu_custom_call.1} parent=1 // pred_check_branch
      %1559 = sbr.rel (0) target = $region41
    $region40: #{tpu_custom_call.1} parent=1 // pred_region
      %s1561 = ssub.s32 32, 32
      %1562 = vsyncadd [#allocation5], %s1561
      %s1564 = sshll.u32 [#allocation4], 4
      %s1565 = int_to_ptr.vmem [resolvable:$true] %s1564
      %1567 = dma.vmem_to_hbm [thread:$0]  %s1565, 32, %s9, [#allocation5]
    $region41: #{tpu_custom_call.1} parent=1 // pred_fallthru
      _
    // Predicated region
    $region42: #{tpu_custom_call.1} parent=1 // pred_check
      _
    $region43: #{tpu_custom_call.1} parent=1 // pred_check_branch
      %1569 = sbr.rel (0) target = $region45
    $region44: #{tpu_custom_call.1} parent=1 // pred_region
      %1570 = dma.done [#allocation5], 32
    $region45: #{tpu_custom_call.1} parent=1 // pred_fallthru
      _
    %1571 = vsyncpa [#allocation5], 1

</llo_original>
